<compile_context>
chip_gen: v7x
topology: tpu7x:2x2x1
jax: 0.10.0
libtpu: 0.0.40
codegen_flags: <defaults>
</compile_context>

<pallas_src>
import jax
import jax.numpy as jnp
from jax.experimental import pallas as pl
from jax.experimental.pallas import tpu as pltpu

H1, H2 = 1000, 500          # module-defined hidden sizes
H1_PAD, H2_PAD = 1024, 512  # lane-dense padded hidden sizes


def _cdiv(a, b):
    return -(-a // b)


def _round_up(x, m):
    return (x + m - 1) // m * m


def _epilogue_dtype():
    """bf16 bias-add + tanh on bf16-capable VPU/EUP chips (v6e/v7x);
    f32 on v5e and older.  Wrong detection only costs perf, not correctness."""
    try:
        kind = jax.devices()[0].device_kind.lower()
    except Exception:
        kind = ""
    if any(f"v{g}" in kind for g in (2, 3, 4, 5)):
        return jnp.float32
    return jnp.bfloat16


def make_energy_mlp_kernel(epi_dtype):
    def energy_mlp_kernel(x_ref, w1_ref, b1_ref, w2_ref, b2_ref, w3_ref,
                          b3_ref, o_ref):
        # Matmul inputs bf16 (native MXU rate, half the weight bytes); f32
        # accumulation via preferred_element_type.  Bias-add + tanh epilogue
        # runs in epi_dtype (bf16 on v6e/v7x, f32 on v5e).  jnp.tanh lowers
        # to a single EUP tanh on TPU, so no exp/reciprocal rewrite needed.
        x = x_ref[...].astype(jnp.bfloat16)                            # (tb, size)
        a1 = jnp.dot(x, w1_ref[...], preferred_element_type=jnp.float32)
        h1 = jnp.tanh(a1.astype(epi_dtype) + b1_ref[...])              # (tb, 1024)
        a2 = jnp.dot(h1.astype(jnp.bfloat16), w2_ref[...],
                     preferred_element_type=jnp.float32)
        h2 = jnp.tanh(a2.astype(epi_dtype) + b2_ref[...])              # (tb, 512)
        a3 = jnp.dot(h2.astype(jnp.bfloat16), w3_ref[...],
                     preferred_element_type=jnp.float32)
        h3 = jnp.tanh(a3.astype(epi_dtype) + b3_ref[...])              # (tb, out_pad)
        o_ref[...] = h3.astype(o_ref.dtype)
    return energy_mlp_kernel


def init_params(key, size, h1=H1, h2=H2):
    """Deterministic init mimicking nn.Linear's uniform(-1/sqrt(in), 1/sqrt(in)).

    Weights are stored as (in_features, out_features) in f32; biases (1, out)."""
    ks = jax.random.split(key, 6)

    def lin(kw, kb, fan_in, fan_out):
        bound = 1.0 / jnp.sqrt(jnp.float32(fan_in))
        w = jax.random.uniform(kw, (fan_in, fan_out), jnp.float32,
                               minval=-bound, maxval=bound)
        b = jax.random.uniform(kb, (1, fan_out), jnp.float32,
                               minval=-bound, maxval=bound)
        return w, b

    w1, b1 = lin(ks[0], ks[1], size, h1)
    w2, b2 = lin(ks[2], ks[3], h1, h2)
    w3, b3 = lin(ks[4], ks[5], h2, size)
    return {"w1": w1, "b1": b1, "w2": w2, "b2": b2, "w3": w3, "b3": b3}


def prepare_kernel_params(p, epi_dtype=None):
    """One-time pad (1000->1024, 500->512, out->mult of 128) + bf16 weight cast.

    Zero padding is exact: padded bias entries are 0 so padded activations are
    tanh(0)=0, and padded weight rows are 0 so they contribute nothing.
    Biases are stored in the epilogue dtype (bf16 on v6e/v7x, f32 on v5e)."""
    if epi_dtype is None:
        epi_dtype = _epilogue_dtype()
    size = p["w1"].shape[0]
    out_pad = _round_up(size, 128)

    w1 = jnp.zeros((size, H1_PAD), jnp.bfloat16).at[:, :H1].set(
        p["w1"].astype(jnp.bfloat16))
    b1 = jnp.zeros((1, H1_PAD), epi_dtype).at[:, :H1].set(
        p["b1"].astype(epi_dtype))
    w2 = jnp.zeros((H1_PAD, H2_PAD), jnp.bfloat16).at[:H1, :H2].set(
        p["w2"].astype(jnp.bfloat16))
    b2 = jnp.zeros((1, H2_PAD), epi_dtype).at[:, :H2].set(
        p["b2"].astype(epi_dtype))
    w3 = jnp.zeros((H2_PAD, out_pad), jnp.bfloat16).at[:H2, :size].set(
        p["w3"].astype(jnp.bfloat16))
    b3 = jnp.zeros((1, out_pad), epi_dtype).at[:, :size].set(
        p["b3"].astype(epi_dtype))
    return {"w1": w1, "b1": b1, "w2": w2, "b2": b2, "w3": w3, "b3": b3,
            "size": size, "out_pad": out_pad}


def _choose_batch_tiling(batch, tile_b):
    """Balanced batch tiling.

    Uses the number of tiles a `tile_b`-row budget implies, then shrinks the
    per-tile row count to the smallest multiple of 8 that still covers the
    batch, so the tail tile wastes <8 rows.  Forces >=2 tiles for megacore
    (v7x) when one tile would otherwise swallow a batch >= 256."""
    n_tiles = max(1, _cdiv(batch, tile_b))
    if n_tiles == 1 and batch >= 256:
        n_tiles = 2
    tb = _round_up(_cdiv(batch, n_tiles), 8)
    b_pad = n_tiles * tb
    return tb, b_pad, n_tiles


def _vmem_limit_bytes(size, out_pad, tb, epi_bytes):
    """Scoped-VMEM budget from actual bytes (weights assumed double-buffered),
    with ~2x headroom, clamped to [32 MiB, 64 MiB]."""
    w = 2 * (size * H1_PAD + H1_PAD * H2_PAD + H2_PAD * out_pad)  # bf16 weights
    b = epi_bytes * (H1_PAD + H2_PAD + out_pad)                   # biases
    io = 2 * tb * (size * 4 + out_pad * 4)                        # x/out, 2 bufs
    act = tb * (H1_PAD + H2_PAD) * (4 + epi_bytes)                # f32 acc + epi
    est = 2 * (2 * (w + b) + io + act)
    return int(min(max(est, 32 * 1024 * 1024), 64 * 1024 * 1024))


def energy_model_forward(x, kp, *, tile_b=512, unpad=True):
    """x: (batch, size) f32 (or bf16).  kp: output of prepare_kernel_params.

    Pass unpad=False inside a Langevin loop to keep the padded (b_pad, out_pad)
    layout across steps and slice only once at the end."""
    batch, size = x.shape
    assert size == kp["size"]
    out_pad = kp["out_pad"]
    epi_dtype = kp["b1"].dtype

    tb, b_pad, n_tiles = _choose_batch_tiling(batch, tile_b)
    if b_pad != batch:
        x = jnp.pad(x, ((0, b_pad - batch), (0, 0)))

    out = pl.pallas_call(
        make_energy_mlp_kernel(epi_dtype),
        out_shape=jax.ShapeDtypeStruct((b_pad, out_pad), jnp.float32),
        grid_spec=pltpu.PrefetchScalarGridSpec(
            num_scalar_prefetch=0,
            grid=(n_tiles,),
            in_specs=[
                # x: tiled over batch.
                pl.BlockSpec((tb, size), lambda i: (i, 0)),
                # Weights/biases: constant index_map -> DMA'd once, kept
                # resident in VMEM across all batch tiles.
                pl.BlockSpec((size, H1_PAD), lambda i: (0, 0)),
                pl.BlockSpec((1, H1_PAD), lambda i: (0, 0)),
                pl.BlockSpec((H1_PAD, H2_PAD), lambda i: (0, 0)),
                pl.BlockSpec((1, H2_PAD), lambda i: (0, 0)),
                pl.BlockSpec((H2_PAD, out_pad), lambda i: (0, 0)),
                pl.BlockSpec((1, out_pad), lambda i: (0, 0)),
            ],
            out_specs=pl.BlockSpec((tb, out_pad), lambda i: (i, 0)),
        ),
        compiler_params=pltpu.CompilerParams(
            dimension_semantics=("parallel",),   # megacore-shard the batch axis
            vmem_limit_bytes=_vmem_limit_bytes(
                size, out_pad, tb, jnp.dtype(epi_dtype).itemsize),
        ),
    )(x, kp["w1"], kp["b1"], kp["w2"], kp["b2"], kp["w3"], kp["b3"])

    if unpad:
        out = out[:batch, :size]
    return out


def reference_forward(x, p):
    h1 = jnp.tanh(x @ p["w1"] + p["b1"])
    h2 = jnp.tanh(h1 @ p["w2"] + p["b2"])
    return jnp.tanh(h2 @ p["w3"] + p["b3"])


if __name__ == "__main__":
    # Small, module-consistent shapes: batch=8, size=32 (hidden dims fixed
    # at 1000 and 500 by the module definition).
    batch, size = 8, 32
    key = jax.random.PRNGKey(0)
    k_x, k_p = jax.random.split(key)

    x = jax.random.normal(k_x, (batch, size), jnp.float32)
    params = init_params(k_p, size)
    kparams = prepare_kernel_params(params)   # one-time pad + bf16 cast;
                                              # reuse across Langevin steps.

    out = energy_model_forward(x, kparams)
    out = jax.block_until_ready(out)

    ref = reference_forward(x, params)
    assert out.shape == (batch, size)
    # Tolerance accounts for bf16 weights (+ bf16 bias/tanh epilogue on
    # v6e/v7x) against the f32 reference; accumulation is still f32.
    max_err = float(jnp.max(jnp.abs(out - ref)))
    assert jnp.allclose(out, ref, atol=1e-1, rtol=0.0), max_err

    # TODO(synk): the training method `go` (Langevin sampling + Adam update)
    # and U()'s autograd are gradient-based training-loop glue, not a
    # forward-pass kernel, and are intentionally not implemented in Pallas.
    print("KERNEL_OK")
</pallas_src>

<mosaic_0001>
module attributes {stable_mosaic.version = 11 : i64} {
  func.func @energy_mlp_kernel(%arg0: i32, %arg1: memref<8x32xf32, #tpu.memory_space<vmem>>, %arg2: memref<32x1024xbf16, #tpu.memory_space<vmem>>, %arg3: memref<1x1024xbf16, #tpu.memory_space<vmem>>, %arg4: memref<1024x512xbf16, #tpu.memory_space<vmem>>, %arg5: memref<1x512xbf16, #tpu.memory_space<vmem>>, %arg6: memref<512x128xbf16, #tpu.memory_space<vmem>>, %arg7: memref<1x128xbf16, #tpu.memory_space<vmem>>, %arg8: memref<8x128xf32, #tpu.memory_space<vmem>>) attributes {dimension_semantics = [#tpu.dimension_semantics<parallel>], iteration_bounds = array<i64: 1>, scalar_prefetch = 0 : i64, scratch_operands = 0 : i64, tpu.core_type = #tpu.core_type<tc>, window_params = [{transform_indices = @transform_0, window_bounds = array<i64: 8, 32>}, {pipeline_mode = #tpu.pipeline_mode<synchronous>, transform_indices = @transform_1, window_bounds = array<i64: 32, 1024>}, {pipeline_mode = #tpu.pipeline_mode<synchronous>, transform_indices = @transform_2, window_bounds = array<i64: 1, 1024>}, {pipeline_mode = #tpu.pipeline_mode<synchronous>, transform_indices = @transform_3, window_bounds = array<i64: 1024, 512>}, {pipeline_mode = #tpu.pipeline_mode<synchronous>, transform_indices = @transform_4, window_bounds = array<i64: 1, 512>}, {pipeline_mode = #tpu.pipeline_mode<synchronous>, transform_indices = @transform_5, window_bounds = array<i64: 512, 128>}, {pipeline_mode = #tpu.pipeline_mode<synchronous>, transform_indices = @transform_6, window_bounds = array<i64: 1, 128>}, {transform_indices = @transform_7, window_bounds = array<i64: 8, 128>}]} {
    %c0 = arith.constant 0 : index
    %c0_0 = arith.constant 0 : index
    %0 = vector.load %arg1[%c0, %c0_0] : memref<8x32xf32, #tpu.memory_space<vmem>>, vector<8x32xf32>
    %1 = arith.truncf %0 : vector<8x32xf32> to vector<8x32xbf16>
    %c0_1 = arith.constant 0 : index
    %c0_2 = arith.constant 0 : index
    %2 = vector.load %arg2[%c0_1, %c0_2] : memref<32x1024xbf16, #tpu.memory_space<vmem>>, vector<32x1024xbf16>
    %cst = arith.constant dense<0.000000e+00> : vector<8x1024xf32>
    %3 = tpu.matmul %1, %2, %cst {dimension_numbers = #tpu.dot_dimension_numbers<[1], [0], [0], [1], [0, 0, 1, 1], [], []>} : vector<8x32xbf16>, vector<32x1024xbf16>, vector<8x1024xf32> -> vector<8x1024xf32>
    %4 = arith.truncf %3 : vector<8x1024xf32> to vector<8x1024xbf16>
    %c0_3 = arith.constant 0 : index
    %c0_4 = arith.constant 0 : index
    %5 = vector.load %arg3[%c0_3, %c0_4] : memref<1x1024xbf16, #tpu.memory_space<vmem>>, vector<1x1024xbf16>
    %6 = vector.broadcast %5 : vector<1x1024xbf16> to vector<8x1024xbf16>
    %7 = arith.addf %4, %6 : vector<8x1024xbf16>
    %8 = math.tanh %7 : vector<8x1024xbf16>
    %c0_5 = arith.constant 0 : index
    %c0_6 = arith.constant 0 : index
    %9 = vector.load %arg4[%c0_5, %c0_6] : memref<1024x512xbf16, #tpu.memory_space<vmem>>, vector<1024x512xbf16>
    %cst_7 = arith.constant dense<0.000000e+00> : vector<8x512xf32>
    %10 = tpu.matmul %8, %9, %cst_7 {dimension_numbers = #tpu.dot_dimension_numbers<[1], [0], [0], [1], [0, 0, 1, 1], [], []>} : vector<8x1024xbf16>, vector<1024x512xbf16>, vector<8x512xf32> -> vector<8x512xf32>
    %11 = arith.truncf %10 : vector<8x512xf32> to vector<8x512xbf16>
    %c0_8 = arith.constant 0 : index
    %c0_9 = arith.constant 0 : index
    %12 = vector.load %arg5[%c0_8, %c0_9] : memref<1x512xbf16, #tpu.memory_space<vmem>>, vector<1x512xbf16>
    %13 = vector.broadcast %12 : vector<1x512xbf16> to vector<8x512xbf16>
    %14 = arith.addf %11, %13 : vector<8x512xbf16>
    %15 = math.tanh %14 : vector<8x512xbf16>
    %c0_10 = arith.constant 0 : index
    %c0_11 = arith.constant 0 : index
    %16 = vector.load %arg6[%c0_10, %c0_11] : memref<512x128xbf16, #tpu.memory_space<vmem>>, vector<512x128xbf16>
    %cst_12 = arith.constant dense<0.000000e+00> : vector<8x128xf32>
    %17 = tpu.matmul %15, %16, %cst_12 {dimension_numbers = #tpu.dot_dimension_numbers<[1], [0], [0], [1], [0, 0, 1, 1], [], []>} : vector<8x512xbf16>, vector<512x128xbf16>, vector<8x128xf32> -> vector<8x128xf32>
    %18 = arith.truncf %17 : vector<8x128xf32> to vector<8x128xbf16>
    %c0_13 = arith.constant 0 : index
    %c0_14 = arith.constant 0 : index
    %19 = vector.load %arg7[%c0_13, %c0_14] : memref<1x128xbf16, #tpu.memory_space<vmem>>, vector<1x128xbf16>
    %20 = vector.broadcast %19 : vector<1x128xbf16> to vector<8x128xbf16>
    %21 = arith.addf %18, %20 : vector<8x128xbf16>
    %22 = math.tanh %21 : vector<8x128xbf16>
    %23 = arith.extf %22 : vector<8x128xbf16> to vector<8x128xf32>
    %c0_15 = arith.constant 0 : index
    %c0_16 = arith.constant 0 : index
    %24 = vector.load %arg8[%c0_15, %c0_16] : memref<8x128xf32, #tpu.memory_space<vmem>>, vector<8x128xf32>
    tpu.vector_store %arg8[%c0_15, %c0_16], %23 {strides = array<i32>} : memref<8x128xf32, #tpu.memory_space<vmem>>, vector<8x128xf32>,
    return
  }
  func.func @transform_0(%arg0: i32) -> (i32, i32) {
    %c0_i32 = arith.constant 0 : i32
    %c0_i32_0 = arith.constant 0 : i32
    return %arg0, %c0_i32 : i32, i32
  }
  func.func @transform_1(%arg0: i32) -> (i32, i32) {
    %c0_i32 = arith.constant 0 : i32
    %c0_i32_0 = arith.constant 0 : i32
    %c0_i32_1 = arith.constant 0 : i32
    return %c0_i32, %c0_i32_0 : i32, i32
  }
  func.func @transform_2(%arg0: i32) -> (i32, i32) {
    %c0_i32 = arith.constant 0 : i32
    %c0_i32_0 = arith.constant 0 : i32
    %c0_i32_1 = arith.constant 0 : i32
    return %c0_i32, %c0_i32_0 : i32, i32
  }
  func.func @transform_3(%arg0: i32) -> (i32, i32) {
    %c0_i32 = arith.constant 0 : i32
    %c0_i32_0 = arith.constant 0 : i32
    %c0_i32_1 = arith.constant 0 : i32
    return %c0_i32, %c0_i32_0 : i32, i32
  }
  func.func @transform_4(%arg0: i32) -> (i32, i32) {
    %c0_i32 = arith.constant 0 : i32
    %c0_i32_0 = arith.constant 0 : i32
    %c0_i32_1 = arith.constant 0 : i32
    return %c0_i32, %c0_i32_0 : i32, i32
  }
  func.func @transform_5(%arg0: i32) -> (i32, i32) {
    %c0_i32 = arith.constant 0 : i32
    %c0_i32_0 = arith.constant 0 : i32
    %c0_i32_1 = arith.constant 0 : i32
    return %c0_i32, %c0_i32_0 : i32, i32
  }
  func.func @transform_6(%arg0: i32) -> (i32, i32) {
    %c0_i32 = arith.constant 0 : i32
    %c0_i32_0 = arith.constant 0 : i32
    %c0_i32_1 = arith.constant 0 : i32
    return %c0_i32, %c0_i32_0 : i32, i32
  }
  func.func @transform_7(%arg0: i32) -> (i32, i32) {
    %c0_i32 = arith.constant 0 : i32
    %c0_i32_0 = arith.constant 0 : i32
    return %arg0, %c0_i32 : i32, i32
  }
}

</mosaic_0001>

<llo_original>
// kernel: tpu_custom_call.1
$region0: #{tpu_custom_call.1}
  #allocation0 [shape = 'u32[]', space=smem, size = 0x4, offset = 0x4, fixed_abs, tag = 'smem constant byte address 0x4 - core index']
  #allocation1 [shape = 'u32[144,128]{1,0:T(1,128)}', space=vmem, size = 0x12000, scoped, tag = 'internal scratch']
  %s0 = inlined_call_operand.hbm [shape: f32[8,32], index: 0, kind: input, shape index: {}]
  %s1 = inlined_call_operand.hbm [shape: bf16[32,1024], index: 1, kind: input, shape index: {}]
  %s2 = inlined_call_operand.hbm [shape: bf16[1,1024], index: 2, kind: input, shape index: {}]
  %s3 = inlined_call_operand.hbm [shape: bf16[1024,512], index: 3, kind: input, shape index: {}]
  %s4 = inlined_call_operand.vmem [shape: bf16[1,512], index: 4, kind: input, shape index: {}]
  %s5 = inlined_call_operand.hbm [shape: bf16[512,128], index: 5, kind: input, shape index: {}]
  %s6 = inlined_call_operand.vmem [shape: bf16[1,128], index: 6, kind: input, shape index: {}]
  %s7 = inlined_call_operand.hbm [shape: f32[8,128], index: 7, kind: output, shape index: {}]
  %s8 = sld [smem:[#allocation0]]
  $region58: #{tpu_custom_call.1} parent=0
    _
  %s10 = ssub.s32 1, %s8
  %s11 = scalar_select 0, %s10, %s8
  $region1: #{tpu_custom_call.1} parent=0
    #allocation2 [shape = 'u8[4096]{0}', space=vmem, size = 0x1000, scoped, tag = 'input window, operand 0, single buffered']
    #allocation3 [shape = 's32[1]{0}', space=sflag, size = 0x4, scoped, tag = 'scoped memory for tpu_custom_call.1']
    #allocation4 [shape = 's32[1]{0}', space=sflag, size = 0x4, scoped, tag = 'scoped memory for tpu_custom_call.1']
    #allocation5 [shape = 'u8[65536]{0}', space=vmem, size = 0x10000, scoped, tag = 'input window, operand 1, single buffered']
    #allocation6 [shape = 's32[1]{0}', space=sflag, size = 0x4, scoped, tag = 'scoped memory for tpu_custom_call.1']
    #allocation7 [shape = 'u8[4096]{0}', space=vmem, size = 0x1000, scoped, tag = 'input window, operand 2, single buffered']
    #allocation8 [shape = 'u8[1048576]{0}', space=vmem, size = 0x100000, scoped, tag = 'input window, operand 3, single buffered']
    #allocation9 [shape = 's32[1]{0}', space=sflag, size = 0x4, scoped, tag = 'scoped memory for tpu_custom_call.1']
    #allocation10 [shape = 'u8[131072]{0}', space=vmem, size = 0x20000, scoped, tag = 'input window, operand 5, single buffered']
    #allocation11 [shape = 'u8[4096]{0}', space=vmem, size = 0x1000, scoped, tag = 'output window, operand 0, single buffered']
    %12 = vsyncpa [#allocation3], 0
    %13 = vsyncpa [#allocation6], 0
    %14 = vsyncpa [#allocation9], 0
    %15 = vsyncpa [#allocation4], 0
    // Predicated region
    $region2: #{tpu_custom_call.1} parent=1 // pred_check
      _
    $region3: #{tpu_custom_call.1} parent=1 // pred_check_branch
      %17 = sbr.rel (0) target = $region5
    $region4: #{tpu_custom_call.1} parent=1 // pred_region
      %s19 = ssub.s32 128, 128
      %20 = vsyncadd [#allocation3], %s19
      %s22 = sshll.u32 [#allocation2], 4
      %s23 = int_to_ptr.vmem [resolvable:$true] %s22
      %25 = dma.hbm_to_vmem [thread:$0]  %s0, 128, %s23, [#allocation3]
    $region5: #{tpu_custom_call.1} parent=1 // pred_fallthru
      _
    // Predicated region
    $region6: #{tpu_custom_call.1} parent=1 // pred_check
      _
    $region7: #{tpu_custom_call.1} parent=1 // pred_check_branch
      %27 = sbr.rel (0) target = $region9
    $region8: #{tpu_custom_call.1} parent=1 // pred_region
      %s29 = ssub.s32 2048, 2048
      %30 = vsyncadd [#allocation6], %s29
      %s31 = sshll.u32 [#allocation5], 4
      %s32 = int_to_ptr.vmem [resolvable:$true] %s31
      %37 = dma.hbm_to_vmem [thread:$0]  %s1, 2048, %s32, [#allocation6], 512, 512, 32
    $region9: #{tpu_custom_call.1} parent=1 // pred_fallthru
      _
    // Predicated region
    $region10: #{tpu_custom_call.1} parent=1 // pred_check
      _
    $region11: #{tpu_custom_call.1} parent=1 // pred_check_branch
      %39 = sbr.rel (0) target = $region13
    $region12: #{tpu_custom_call.1} parent=1 // pred_region
      %s41 = ssub.s32 128, 128
      %42 = vsyncadd [#allocation6], %s41
      %s44 = sshll.u32 [#allocation7], 4
      %s45 = int_to_ptr.vmem [resolvable:$true] %s44
      %47 = dma.hbm_to_vmem [thread:$0]  %s2, 128, %s45, [#allocation6]
    $region13: #{tpu_custom_call.1} parent=1 // pred_fallthru
      _
    // Predicated region
    $region14: #{tpu_custom_call.1} parent=1 // pred_check
      _
    $region15: #{tpu_custom_call.1} parent=1 // pred_check_branch
      %49 = sbr.rel (0) target = $region17
    $region16: #{tpu_custom_call.1} parent=1 // pred_region
      %s51 = ssub.s32 32768, 32768
      %52 = vsyncadd [#allocation9], %s51
      %s53 = sshll.u32 [#allocation8], 4
      %s54 = int_to_ptr.vmem [resolvable:$true] %s53
      %59 = dma.hbm_to_vmem [thread:$0]  %s3, 32768, %s54, [#allocation9], 256, 256, 16
    $region17: #{tpu_custom_call.1} parent=1 // pred_fallthru
      _
    // Predicated region
    $region18: #{tpu_custom_call.1} parent=1 // pred_check
      _
    $region19: #{tpu_custom_call.1} parent=1 // pred_check_branch
      %61 = sbr.rel (0) target = $region21
    $region20: #{tpu_custom_call.1} parent=1 // pred_region
      _
    $region21: #{tpu_custom_call.1} parent=1 // pred_fallthru
      _
    // Predicated region
    $region22: #{tpu_custom_call.1} parent=1 // pred_check
      _
    $region23: #{tpu_custom_call.1} parent=1 // pred_check_branch
      %63 = sbr.rel (0) target = $region25
    $region24: #{tpu_custom_call.1} parent=1 // pred_region
      %s65 = ssub.s32 4096, 4096
      %66 = vsyncadd [#allocation9], %s65
      %s67 = sshll.u32 [#allocation10], 4
      %s68 = int_to_ptr.vmem [resolvable:$true] %s67
      %73 = dma.hbm_to_vmem [thread:$0]  %s5, 4096, %s68, [#allocation9], 64, 64, 4
    $region25: #{tpu_custom_call.1} parent=1 // pred_fallthru
      _
    // Predicated region
    $region26: #{tpu_custom_call.1} parent=1 // pred_check
      _
    $region27: #{tpu_custom_call.1} parent=1 // pred_check_branch
      %75 = sbr.rel (0) target = $region29
    $region28: #{tpu_custom_call.1} parent=1 // pred_region
      _
    $region29: #{tpu_custom_call.1} parent=1 // pred_fallthru
      _
    // Predicated region
    $region30: #{tpu_custom_call.1} parent=1 // pred_check
      _
    $region31: #{tpu_custom_call.1} parent=1 // pred_check_branch
      %77 = sbr.rel (0) target = $region33
    $region32: #{tpu_custom_call.1} parent=1 // pred_region
      %78 = dma.done [#allocation3], 128
    $region33: #{tpu_custom_call.1} parent=1 // pred_fallthru
      _
    // Predicated region
    $region34: #{tpu_custom_call.1} parent=1 // pred_check
      _
    $region35: #{tpu_custom_call.1} parent=1 // pred_check_branch
      %80 = sbr.rel (0) target = $region37
    $region36: #{tpu_custom_call.1} parent=1 // pred_region
      %81 = dma.done [#allocation6], 2048
    $region37: #{tpu_custom_call.1} parent=1 // pred_fallthru
      _
    // Predicated region
    $region38: #{tpu_custom_call.1} parent=1 // pred_check
      _
    $region39: #{tpu_custom_call.1} parent=1 // pred_check_branch
      %83 = sbr.rel (0) target = $region41
    $region40: #{tpu_custom_call.1} parent=1 // pred_region
      %84 = dma.done [#allocation6], 128
    $region41: #{tpu_custom_call.1} parent=1 // pred_fallthru
      _
    // Predicated region
    $region42: #{tpu_custom_call.1} parent=1 // pred_check
      _
    $region43: #{tpu_custom_call.1} parent=1 // pred_check_branch
      %86 = sbr.rel (0) target = $region45
    $region44: #{tpu_custom_call.1} parent=1 // pred_region
      %87 = dma.done [#allocation9], 32768
    $region45: #{tpu_custom_call.1} parent=1 // pred_fallthru
      _
    // Predicated region
    $region46: #{tpu_custom_call.1} parent=1 // pred_check
      _
    $region47: #{tpu_custom_call.1} parent=1 // pred_check_branch
      %89 = sbr.rel (0) target = $region49
    $region48: #{tpu_custom_call.1} parent=1 // pred_region
      %90 = dma.done [#allocation9], 4096
    $region49: #{tpu_custom_call.1} parent=1 // pred_fallthru
      _
    %v92 = vld [vmem:[#allocation2] sm:$0xff]
    %v93 = vpack.c.bf16 %v92, %v92
    %v94 = vld [vmem:[#allocation5] sm:$0xff]
    %v95 = vld [vmem:[#allocation5 + $0x8] sm:$0xff]
    %v96 = vld [vmem:[#allocation5 + $0x10] sm:$0xff]
    %v97 = vld [vmem:[#allocation5 + $0x18] sm:$0xff]
    %v98 = vld [vmem:[#allocation5 + $0x20] sm:$0xff]
    %v99 = vld [vmem:[#allocation5 + $0x28] sm:$0xff]
    %v100 = vld [vmem:[#allocation5 + $0x30] sm:$0xff]
    %v101 = vld [vmem:[#allocation5 + $0x38] sm:$0xff]
    %v102 = vld [vmem:[#allocation5 + $0x40] sm:$0xff]
    %v103 = vld [vmem:[#allocation5 + $0x48] sm:$0xff]
    %v104 = vld [vmem:[#allocation5 + $0x50] sm:$0xff]
    %v105 = vld [vmem:[#allocation5 + $0x58] sm:$0xff]
    %v106 = vld [vmem:[#allocation5 + $0x60] sm:$0xff]
    %v107 = vld [vmem:[#allocation5 + $0x68] sm:$0xff]
    %v108 = vld [vmem:[#allocation5 + $0x70] sm:$0xff]
    %v109 = vld [vmem:[#allocation5 + $0x78] sm:$0xff]
    %v126 = vunpack.c.l.b16 %v94
    %v127 = vunpack.c.h.b16 %v94
    %v128 = vunpack.c.l.b16 %v95
    %v129 = vunpack.c.h.b16 %v95
    %v130 = vunpack.c.l.b16 %v96
    %v131 = vunpack.c.h.b16 %v96
    %v132 = vunpack.c.l.b16 %v97
    %v133 = vunpack.c.h.b16 %v97
    %v134 = vunpack.c.l.b16 %v98
    %v135 = vunpack.c.h.b16 %v98
    %v136 = vunpack.c.l.b16 %v99
    %v137 = vunpack.c.h.b16 %v99
    %v138 = vunpack.c.l.b16 %v100
    %v139 = vunpack.c.h.b16 %v100
    %v140 = vunpack.c.l.b16 %v101
    %v141 = vunpack.c.h.b16 %v101
    %v142 = vunpack.c.l.b16 %v102
    %v143 = vunpack.c.h.b16 %v102
    %v144 = vunpack.c.l.b16 %v103
    %v145 = vunpack.c.h.b16 %v103
    %v146 = vunpack.c.l.b16 %v104
    %v147 = vunpack.c.h.b16 %v104
    %v148 = vunpack.c.l.b16 %v105
    %v149 = vunpack.c.h.b16 %v105
    %v150 = vunpack.c.l.b16 %v106
    %v151 = vunpack.c.h.b16 %v106
    %v152 = vunpack.c.l.b16 %v107
    %v153 = vunpack.c.h.b16 %v107
    %v154 = vunpack.c.l.b16 %v108
    %v155 = vunpack.c.h.b16 %v108
    %v156 = vunpack.c.l.b16 %v109
    %v157 = vunpack.c.h.b16 %v109
    %v158 = vpack.c.b16 %v134, %v126
    %v159 = vpack.c.b16 %v135, %v127
    %v160 = vpack.c.b16 %v136, %v128
    %v161 = vpack.c.b16 %v137, %v129
    %v162 = vpack.c.b16 %v138, %v130
    %v163 = vpack.c.b16 %v139, %v131
    %v164 = vpack.c.b16 %v140, %v132
    %v165 = vpack.c.b16 %v141, %v133
    %v166 = vpack.c.b16 %v150, %v142
    %v167 = vpack.c.b16 %v151, %v143
    %v168 = vpack.c.b16 %v152, %v144
    %v169 = vpack.c.b16 %v153, %v145
    %v170 = vpack.c.b16 %v154, %v146
    %v171 = vpack.c.b16 %v155, %v147
    %v172 = vpack.c.b16 %v156, %v148
    %v173 = vpack.c.b16 %v157, %v149
    %vm190 = vcmask 261120
    %v192 = vsel %vm190, %v93, 0
    %194 = vmatprep.subr.bf16.mxu0 %v159
    %195 = vmatpush1.bf16.msra.mxu0 %v158
    %196 = vmatprep.subr.bf16.mxu0 %v167
    %197 = vmatpush1.bf16.msra.mxu0 %v166
    %198 = vmatprep.subr.bf16.mxu0 0
    %199 = vmatpush1.bf16.msra.mxu0 0
    %200 = vmatprep.subr.bf16.mxu0 0
    %201 = vmatpush1.bf16.msra.mxu0 0
    %202 = vmatprep.subr.bf16.mxu0 0
    %203 = vmatpush1.bf16.msra.mxu0 0
    %204 = vmatprep.subr.bf16.mxu0 0
    %205 = vmatpush1.bf16.msra.mxu0 0
    %206 = vmatprep.subr.bf16.mxu0 0
    %207 = vmatpush1.bf16.msra.mxu0 0
    %208 = vmatprep.subr.bf16.mxu0 0
    %209 = vmatpush1.bf16.msra.mxu0 0
    %210 = vmatprep.subr.bf16.mxu0 0
    %211 = vmatpush1.bf16.msra.mxu0 0
    %212 = vmatprep.subr.bf16.mxu0 0
    %213 = vmatpush1.bf16.msra.mxu0 0
    %214 = vmatprep.subr.bf16.mxu0 0
    %215 = vmatpush1.bf16.msra.mxu0 0
    %216 = vmatprep.subr.bf16.mxu0 0
    %217 = vmatpush1.bf16.msra.mxu0 0
    %218 = vmatprep.subr.bf16.mxu0 0
    %219 = vmatpush1.bf16.msra.mxu0 0
    %220 = vmatprep.subr.bf16.mxu0 0
    %221 = vmatpush1.bf16.msra.mxu0 0
    %222 = vmatprep.subr.bf16.mxu0 0
    %223 = vmatpush1.bf16.msra.mxu0 0
    %224 = vmatprep.subr.bf16.mxu0 0
    %225 = vmatpush1.bf16.msra.mxu0 0
    %226 = vmatprep.mubr.bf16.mxu0 0
    %227 = vmatmul.mubr.bf16.gmra.mrb[0].mxu0 %v192
    %v228 = vpop.f32.mrb[0].mxu0
    %v229 = vadd.f32 0.0, %v228
    %v230 = vpop.f32.mrb[0].mxu0
    %v231 = vadd.f32 0.0, %v230
    %v232 = vpop.f32.mrb[0].mxu0
    %v233 = vpop.f32.mrb[0].mxu0
    %234 = vdwg.mxu0
    %235 = vmatprep.subr.bf16.mxu0 %v161
    %236 = vmatpush1.bf16.msra.mxu0 %v160
    %237 = vmatprep.subr.bf16.mxu0 %v169
    %238 = vmatpush1.bf16.msra.mxu0 %v168
    %239 = vmatprep.subr.bf16.mxu0 0
    %240 = vmatpush1.bf16.msra.mxu0 0
    %241 = vmatprep.subr.bf16.mxu0 0
    %242 = vmatpush1.bf16.msra.mxu0 0
    %243 = vmatprep.subr.bf16.mxu0 0
    %244 = vmatpush1.bf16.msra.mxu0 0
    %245 = vmatprep.subr.bf16.mxu0 0
    %246 = vmatpush1.bf16.msra.mxu0 0
    %247 = vmatprep.subr.bf16.mxu0 0
    %248 = vmatpush1.bf16.msra.mxu0 0
    %249 = vmatprep.subr.bf16.mxu0 0
    %250 = vmatpush1.bf16.msra.mxu0 0
    %251 = vmatprep.subr.bf16.mxu0 0
    %252 = vmatpush1.bf16.msra.mxu0 0
    %253 = vmatprep.subr.bf16.mxu0 0
    %254 = vmatpush1.bf16.msra.mxu0 0
    %255 = vmatprep.subr.bf16.mxu0 0
    %256 = vmatpush1.bf16.msra.mxu0 0
    %257 = vmatprep.subr.bf16.mxu0 0
    %258 = vmatpush1.bf16.msra.mxu0 0
    %259 = vmatprep.subr.bf16.mxu0 0
    %260 = vmatpush1.bf16.msra.mxu0 0
    %261 = vmatprep.subr.bf16.mxu0 0
    %262 = vmatpush1.bf16.msra.mxu0 0
    %263 = vmatprep.subr.bf16.mxu0 0
    %264 = vmatpush1.bf16.msra.mxu0 0
    %265 = vmatprep.subr.bf16.mxu0 0
    %266 = vmatpush1.bf16.msra.mxu0 0
    %267 = vmatprep.mubr.bf16.mxu0 0
    %268 = vmatmul.mubr.bf16.gmra.mrb[0].mxu0 %v192
    %v269 = vpop.f32.mrb[0].mxu0
    %v270 = vadd.f32 0.0, %v269
    %v271 = vpop.f32.mrb[0].mxu0
    %v272 = vadd.f32 0.0, %v271
    %v273 = vpop.f32.mrb[0].mxu0
    %v274 = vpop.f32.mrb[0].mxu0
    %275 = vdwg.mxu0
    %276 = vmatprep.subr.bf16.mxu0 %v163
    %277 = vmatpush1.bf16.msra.mxu0 %v162
    %278 = vmatprep.subr.bf16.mxu0 %v171
    %279 = vmatpush1.bf16.msra.mxu0 %v170
    %280 = vmatprep.subr.bf16.mxu0 0
    %281 = vmatpush1.bf16.msra.mxu0 0
    %282 = vmatprep.subr.bf16.mxu0 0
    %283 = vmatpush1.bf16.msra.mxu0 0
    %284 = vmatprep.subr.bf16.mxu0 0
    %285 = vmatpush1.bf16.msra.mxu0 0
    %286 = vmatprep.subr.bf16.mxu0 0
    %287 = vmatpush1.bf16.msra.mxu0 0
    %288 = vmatprep.subr.bf16.mxu0 0
    %289 = vmatpush1.bf16.msra.mxu0 0
    %290 = vmatprep.subr.bf16.mxu0 0
    %291 = vmatpush1.bf16.msra.mxu0 0
    %292 = vmatprep.subr.bf16.mxu0 0
    %293 = vmatpush1.bf16.msra.mxu0 0
    %294 = vmatprep.subr.bf16.mxu0 0
    %295 = vmatpush1.bf16.msra.mxu0 0
    %296 = vmatprep.subr.bf16.mxu0 0
    %297 = vmatpush1.bf16.msra.mxu0 0
    %298 = vmatprep.subr.bf16.mxu0 0
    %299 = vmatpush1.bf16.msra.mxu0 0
    %300 = vmatprep.subr.bf16.mxu0 0
    %301 = vmatpush1.bf16.msra.mxu0 0
    %302 = vmatprep.subr.bf16.mxu0 0
    %303 = vmatpush1.bf16.msra.mxu0 0
    %304 = vmatprep.subr.bf16.mxu0 0
    %305 = vmatpush1.bf16.msra.mxu0 0
    %306 = vmatprep.subr.bf16.mxu0 0
    %307 = vmatpush1.bf16.msra.mxu0 0
    %308 = vmatprep.mubr.bf16.mxu0 0
    %309 = vmatmul.mubr.bf16.gmra.mrb[0].mxu0 %v192
    %v310 = vpop.f32.mrb[0].mxu0
    %v311 = vadd.f32 0.0, %v310
    %v312 = vpop.f32.mrb[0].mxu0
    %v313 = vadd.f32 0.0, %v312
    %v314 = vpop.f32.mrb[0].mxu0
    %v315 = vpop.f32.mrb[0].mxu0
    %316 = vdwg.mxu0
    %317 = vmatprep.subr.bf16.mxu0 %v165
    %318 = vmatpush1.bf16.msra.mxu0 %v164
    %319 = vmatprep.subr.bf16.mxu0 %v173
    %320 = vmatpush1.bf16.msra.mxu0 %v172
    %321 = vmatprep.subr.bf16.mxu0 0
    %322 = vmatpush1.bf16.msra.mxu0 0
    %323 = vmatprep.subr.bf16.mxu0 0
    %324 = vmatpush1.bf16.msra.mxu0 0
    %325 = vmatprep.subr.bf16.mxu0 0
    %326 = vmatpush1.bf16.msra.mxu0 0
    %327 = vmatprep.subr.bf16.mxu0 0
    %328 = vmatpush1.bf16.msra.mxu0 0
    %329 = vmatprep.subr.bf16.mxu0 0
    %330 = vmatpush1.bf16.msra.mxu0 0
    %331 = vmatprep.subr.bf16.mxu0 0
    %332 = vmatpush1.bf16.msra.mxu0 0
    %333 = vmatprep.subr.bf16.mxu0 0
    %334 = vmatpush1.bf16.msra.mxu0 0
    %335 = vmatprep.subr.bf16.mxu0 0
    %336 = vmatpush1.bf16.msra.mxu0 0
    %337 = vmatprep.subr.bf16.mxu0 0
    %338 = vmatpush1.bf16.msra.mxu0 0
    %339 = vmatprep.subr.bf16.mxu0 0
    %340 = vmatpush1.bf16.msra.mxu0 0
    %341 = vmatprep.subr.bf16.mxu0 0
    %342 = vmatpush1.bf16.msra.mxu0 0
    %343 = vmatprep.subr.bf16.mxu0 0
    %344 = vmatpush1.bf16.msra.mxu0 0
    %345 = vmatprep.subr.bf16.mxu0 0
    %346 = vmatpush1.bf16.msra.mxu0 0
    %347 = vmatprep.subr.bf16.mxu0 0
    %348 = vmatpush1.bf16.msra.mxu0 0
    %349 = vmatprep.mubr.bf16.mxu0 0
    %350 = vmatmul.mubr.bf16.gmra.mrb[0].mxu0 %v192
    %v351 = vpop.f32.mrb[0].mxu0
    %v352 = vadd.f32 0.0, %v351
    %v353 = vpop.f32.mrb[0].mxu0
    %v354 = vadd.f32 0.0, %v353
    %v355 = vpop.f32.mrb[0].mxu0
    %v356 = vpop.f32.mrb[0].mxu0
    %357 = vdwg.mxu0
    %v358 = vpack.c.bf16 %v229, %v229
    %v359 = vpack.c.bf16 %v231, %v231
    %v360 = vpack.c.bf16 %v270, %v270
    %v361 = vpack.c.bf16 %v272, %v272
    %v362 = vpack.c.bf16 %v311, %v311
    %v363 = vpack.c.bf16 %v313, %v313
    %v364 = vpack.c.bf16 %v352, %v352
    %v365 = vpack.c.bf16 %v354, %v354
    %v366 = vld [vmem:[#allocation7] sm:$0xff]
    %v368 = vcombine.high %v366, %v366
    %v370 = vunpack.c.l.s4 1966171168
    %v371 = vunpack.c.0.s8 %v370
    %v372 = vlaneseq
    %v373 = vshrl.u32 %v372, 7
    %v374 = vsub.s32 %v371, %v373
    %v375 = vrot.slane %v366, %v374
    %v377 = vunpack.c.l.s4 1966171168
    %v378 = vunpack.c.0.s8 %v377
    %v379 = vlaneseq
    %v380 = vshrl.u32 %v379, 7
    %v381 = vsub.s32 %v378, %v380
    %v382 = vrot.slane %v368, %v381
    %v383 = vcombine.high %v375, %v375
    %v384 = vcombine.high %v382, %v382
    %v386 = vunpack.c.l.s4 1966171168
    %v387 = vunpack.c.0.s8 %v386
    %v388 = vlaneseq
    %v389 = vshrl.u32 %v388, 7
    %v390 = vsub.s32 %v387, %v389
    %v391 = vrot.slane %v375, %v390
    %v393 = vunpack.c.l.s4 1966171168
    %v394 = vunpack.c.0.s8 %v393
    %v395 = vlaneseq
    %v396 = vshrl.u32 %v395, 7
    %v397 = vsub.s32 %v394, %v396
    %v398 = vrot.slane %v382, %v397
    %v400 = vunpack.c.l.s4 1966171168
    %v401 = vunpack.c.0.s8 %v400
    %v402 = vlaneseq
    %v403 = vshrl.u32 %v402, 7
    %v404 = vsub.s32 %v401, %v403
    %v405 = vrot.slane %v383, %v404
    %v407 = vunpack.c.l.s4 1966171168
    %v408 = vunpack.c.0.s8 %v407
    %v409 = vlaneseq
    %v410 = vshrl.u32 %v409, 7
    %v411 = vsub.s32 %v408, %v410
    %v412 = vrot.slane %v384, %v411
    %v413 = vcombine.high %v391, %v391
    %v414 = vcombine.high %v398, %v398
    %v415 = vcombine.high %v405, %v405
    %v416 = vcombine.high %v412, %v412
    %v418 = vpack.i.b16 %v391, %v391
    %v420 = vlaneseq
    %v421 = vshrl.u32 %v420, 7
    %v422 = vsub.s32 0, %v421
    %v423 = vrot.slane %v418, %v422
    %v425 = vpack.i.b16 %v405, %v405
    %v427 = vlaneseq
    %v428 = vshrl.u32 %v427, 7
    %v429 = vsub.s32 0, %v428
    %v430 = vrot.slane %v425, %v429
    %v432 = vpack.i.b16 %v413, %v413
    %v434 = vlaneseq
    %v435 = vshrl.u32 %v434, 7
    %v436 = vsub.s32 0, %v435
    %v437 = vrot.slane %v432, %v436
    %v439 = vpack.i.b16 %v415, %v415
    %v441 = vlaneseq
    %v442 = vshrl.u32 %v441, 7
    %v443 = vsub.s32 0, %v442
    %v444 = vrot.slane %v439, %v443
    %v446 = vpack.i.b16 %v398, %v398
    %v448 = vlaneseq
    %v449 = vshrl.u32 %v448, 7
    %v450 = vsub.s32 0, %v449
    %v451 = vrot.slane %v446, %v450
    %v453 = vpack.i.b16 %v412, %v412
    %v455 = vlaneseq
    %v456 = vshrl.u32 %v455, 7
    %v457 = vsub.s32 0, %v456
    %v458 = vrot.slane %v453, %v457
    %v460 = vpack.i.b16 %v414, %v414
    %v462 = vlaneseq
    %v463 = vshrl.u32 %v462, 7
    %v464 = vsub.s32 0, %v463
    %v465 = vrot.slane %v460, %v464
    %v467 = vpack.i.b16 %v416, %v416
    %v469 = vlaneseq
    %v470 = vshrl.u32 %v469, 7
    %v471 = vsub.s32 0, %v470
    %v472 = vrot.slane %v467, %v471
    %v473 = vadd.bf16 %v358, %v423
    %v474 = vadd.bf16 %v359, %v430
    %v475 = vadd.bf16 %v360, %v437
    %v476 = vadd.bf16 %v361, %v444
    %v477 = vadd.bf16 %v362, %v451
    %v478 = vadd.bf16 %v363, %v458
    %v479 = vadd.bf16 %v364, %v465
    %v480 = vadd.bf16 %v365, %v472
    %v481 = vtanh.bf16.pop %v473
    %v482 = vtanh.bf16.pop %v474
    %v483 = vtanh.bf16.pop %v475
    %v484 = vtanh.bf16.pop %v476
    %v485 = vtanh.bf16.pop %v477
    %v486 = vtanh.bf16.pop %v478
    %v487 = vtanh.bf16.pop %v479
    %v488 = vtanh.bf16.pop %v480
    %v489 = vld [vmem:[#allocation8] sm:$0xff]
    %v490 = vld [vmem:[#allocation8 + $0x8] sm:$0xff]
    %v491 = vld [vmem:[#allocation8 + $0x10] sm:$0xff]
    %v492 = vld [vmem:[#allocation8 + $0x18] sm:$0xff]
    %v493 = vld [vmem:[#allocation8 + $0x20] sm:$0xff]
    %v494 = vld [vmem:[#allocation8 + $0x28] sm:$0xff]
    %v495 = vld [vmem:[#allocation8 + $0x30] sm:$0xff]
    %v496 = vld [vmem:[#allocation8 + $0x38] sm:$0xff]
    %v497 = vld [vmem:[#allocation8 + $0x40] sm:$0xff]
    %v498 = vld [vmem:[#allocation8 + $0x48] sm:$0xff]
    %v499 = vld [vmem:[#allocation8 + $0x50] sm:$0xff]
    %v500 = vld [vmem:[#allocation8 + $0x58] sm:$0xff]
    %v501 = vld [vmem:[#allocation8 + $0x60] sm:$0xff]
    %v502 = vld [vmem:[#allocation8 + $0x68] sm:$0xff]
    %v503 = vld [vmem:[#allocation8 + $0x70] sm:$0xff]
    %v504 = vld [vmem:[#allocation8 + $0x78] sm:$0xff]
    %v505 = vld [vmem:[#allocation8 + $0x80] sm:$0xff]
    %v506 = vld [vmem:[#allocation8 + $0x88] sm:$0xff]
    %v507 = vld [vmem:[#allocation8 + $0x90] sm:$0xff]
    %v508 = vld [vmem:[#allocation8 + $0x98] sm:$0xff]
    %v509 = vld [vmem:[#allocation8 + $0xa0] sm:$0xff]
    %v510 = vld [vmem:[#allocation8 + $0xa8] sm:$0xff]
    %v511 = vld [vmem:[#allocation8 + $0xb0] sm:$0xff]
    %v512 = vld [vmem:[#allocation8 + $0xb8] sm:$0xff]
    %v513 = vld [vmem:[#allocation8 + $0xc0] sm:$0xff]
    %v514 = vld [vmem:[#allocation8 + $0xc8] sm:$0xff]
    %v515 = vld [vmem:[#allocation8 + $0xd0] sm:$0xff]
    %v516 = vld [vmem:[#allocation8 + $0xd8] sm:$0xff]
    %v517 = vld [vmem:[#allocation8 + $0xe0] sm:$0xff]
    %v518 = vld [vmem:[#allocation8 + $0xe8] sm:$0xff]
    %v519 = vld [vmem:[#allocation8 + $0xf0] sm:$0xff]
    %v520 = vld [vmem:[#allocation8 + $0xf8] sm:$0xff]
    %v521 = vld [vmem:[#allocation8 + $0x100] sm:$0xff]
    %v522 = vld [vmem:[#allocation8 + $0x108] sm:$0xff]
    %v523 = vld [vmem:[#allocation8 + $0x110] sm:$0xff]
    %v524 = vld [vmem:[#allocation8 + $0x118] sm:$0xff]
    %v525 = vld [vmem:[#allocation8 + $0x120] sm:$0xff]
    %v526 = vld [vmem:[#allocation8 + $0x128] sm:$0xff]
    %v527 = vld [vmem:[#allocation8 + $0x130] sm:$0xff]
    %v528 = vld [vmem:[#allocation8 + $0x138] sm:$0xff]
    %v529 = vld [vmem:[#allocation8 + $0x140] sm:$0xff]
    %v530 = vld [vmem:[#allocation8 + $0x148] sm:$0xff]
    %v531 = vld [vmem:[#allocation8 + $0x150] sm:$0xff]
    %v532 = vld [vmem:[#allocation8 + $0x158] sm:$0xff]
    %v533 = vld [vmem:[#allocation8 + $0x160] sm:$0xff]
    %v534 = vld [vmem:[#allocation8 + $0x168] sm:$0xff]
    %v535 = vld [vmem:[#allocation8 + $0x170] sm:$0xff]
    %v536 = vld [vmem:[#allocation8 + $0x178] sm:$0xff]
    %v537 = vld [vmem:[#allocation8 + $0x180] sm:$0xff]
    %v538 = vld [vmem:[#allocation8 + $0x188] sm:$0xff]
    %v539 = vld [vmem:[#allocation8 + $0x190] sm:$0xff]
    %v540 = vld [vmem:[#allocation8 + $0x198] sm:$0xff]
    %v541 = vld [vmem:[#allocation8 + $0x1a0] sm:$0xff]
    %v542 = vld [vmem:[#allocation8 + $0x1a8] sm:$0xff]
    %v543 = vld [vmem:[#allocation8 + $0x1b0] sm:$0xff]
    %v544 = vld [vmem:[#allocation8 + $0x1b8] sm:$0xff]
    %v545 = vld [vmem:[#allocation8 + $0x1c0] sm:$0xff]
    %v546 = vld [vmem:[#allocation8 + $0x1c8] sm:$0xff]
    %v547 = vld [vmem:[#allocation8 + $0x1d0] sm:$0xff]
    %v548 = vld [vmem:[#allocation8 + $0x1d8] sm:$0xff]
    %v549 = vld [vmem:[#allocation8 + $0x1e0] sm:$0xff]
    %v550 = vld [vmem:[#allocation8 + $0x1e8] sm:$0xff]
    %v551 = vld [vmem:[#allocation8 + $0x1f0] sm:$0xff]
    %v552 = vld [vmem:[#allocation8 + $0x1f8] sm:$0xff]
    %v553 = vld [vmem:[#allocation8 + $0x200] sm:$0xff]
    %v554 = vld [vmem:[#allocation8 + $0x208] sm:$0xff]
    %v555 = vld [vmem:[#allocation8 + $0x210] sm:$0xff]
    %v556 = vld [vmem:[#allocation8 + $0x218] sm:$0xff]
    %v557 = vld [vmem:[#allocation8 + $0x220] sm:$0xff]
    %v558 = vld [vmem:[#allocation8 + $0x228] sm:$0xff]
    %v559 = vld [vmem:[#allocation8 + $0x230] sm:$0xff]
    %v560 = vld [vmem:[#allocation8 + $0x238] sm:$0xff]
    %v561 = vld [vmem:[#allocation8 + $0x240] sm:$0xff]
    %v562 = vld [vmem:[#allocation8 + $0x248] sm:$0xff]
    %v563 = vld [vmem:[#allocation8 + $0x250] sm:$0xff]
    %v564 = vld [vmem:[#allocation8 + $0x258] sm:$0xff]
    %v565 = vld [vmem:[#allocation8 + $0x260] sm:$0xff]
    %v566 = vld [vmem:[#allocation8 + $0x268] sm:$0xff]
    %v567 = vld [vmem:[#allocation8 + $0x270] sm:$0xff]
    %v568 = vld [vmem:[#allocation8 + $0x278] sm:$0xff]
    %v569 = vld [vmem:[#allocation8 + $0x280] sm:$0xff]
    %v570 = vld [vmem:[#allocation8 + $0x288] sm:$0xff]
    %v571 = vld [vmem:[#allocation8 + $0x290] sm:$0xff]
    %v572 = vld [vmem:[#allocation8 + $0x298] sm:$0xff]
    %v573 = vld [vmem:[#allocation8 + $0x2a0] sm:$0xff]
    %v574 = vld [vmem:[#allocation8 + $0x2a8] sm:$0xff]
    %v575 = vld [vmem:[#allocation8 + $0x2b0] sm:$0xff]
    %v576 = vld [vmem:[#allocation8 + $0x2b8] sm:$0xff]
    %v577 = vld [vmem:[#allocation8 + $0x2c0] sm:$0xff]
    %v578 = vld [vmem:[#allocation8 + $0x2c8] sm:$0xff]
    %v579 = vld [vmem:[#allocation8 + $0x2d0] sm:$0xff]
    %v580 = vld [vmem:[#allocation8 + $0x2d8] sm:$0xff]
    %v581 = vld [vmem:[#allocation8 + $0x2e0] sm:$0xff]
    %v582 = vld [vmem:[#allocation8 + $0x2e8] sm:$0xff]
    %v583 = vld [vmem:[#allocation8 + $0x2f0] sm:$0xff]
    %v584 = vld [vmem:[#allocation8 + $0x2f8] sm:$0xff]
    %v585 = vld [vmem:[#allocation8 + $0x300] sm:$0xff]
    %v586 = vld [vmem:[#allocation8 + $0x308] sm:$0xff]
    %v587 = vld [vmem:[#allocation8 + $0x310] sm:$0xff]
    %v588 = vld [vmem:[#allocation8 + $0x318] sm:$0xff]
    %v589 = vld [vmem:[#allocation8 + $0x320] sm:$0xff]
    %v590 = vld [vmem:[#allocation8 + $0x328] sm:$0xff]
    %v591 = vld [vmem:[#allocation8 + $0x330] sm:$0xff]
    %v592 = vld [vmem:[#allocation8 + $0x338] sm:$0xff]
    %v593 = vld [vmem:[#allocation8 + $0x340] sm:$0xff]
    %v594 = vld [vmem:[#allocation8 + $0x348] sm:$0xff]
    %v595 = vld [vmem:[#allocation8 + $0x350] sm:$0xff]
    %v596 = vld [vmem:[#allocation8 + $0x358] sm:$0xff]
    %v597 = vld [vmem:[#allocation8 + $0x360] sm:$0xff]
    %v598 = vld [vmem:[#allocation8 + $0x368] sm:$0xff]
    %v599 = vld [vmem:[#allocation8 + $0x370] sm:$0xff]
    %v600 = vld [vmem:[#allocation8 + $0x378] sm:$0xff]
    %v601 = vld [vmem:[#allocation8 + $0x380] sm:$0xff]
    %v602 = vld [vmem:[#allocation8 + $0x388] sm:$0xff]
    %v603 = vld [vmem:[#allocation8 + $0x390] sm:$0xff]
    %v604 = vld [vmem:[#allocation8 + $0x398] sm:$0xff]
    %v605 = vld [vmem:[#allocation8 + $0x3a0] sm:$0xff]
    %v606 = vld [vmem:[#allocation8 + $0x3a8] sm:$0xff]
    %v607 = vld [vmem:[#allocation8 + $0x3b0] sm:$0xff]
    %v608 = vld [vmem:[#allocation8 + $0x3b8] sm:$0xff]
    %v609 = vld [vmem:[#allocation8 + $0x3c0] sm:$0xff]
    %v610 = vld [vmem:[#allocation8 + $0x3c8] sm:$0xff]
    %v611 = vld [vmem:[#allocation8 + $0x3d0] sm:$0xff]
    %v612 = vld [vmem:[#allocation8 + $0x3d8] sm:$0xff]
    %v613 = vld [vmem:[#allocation8 + $0x3e0] sm:$0xff]
    %v614 = vld [vmem:[#allocation8 + $0x3e8] sm:$0xff]
    %v615 = vld [vmem:[#allocation8 + $0x3f0] sm:$0xff]
    %v616 = vld [vmem:[#allocation8 + $0x3f8] sm:$0xff]
    %v617 = vld [vmem:[#allocation8 + $0x400] sm:$0xff]
    %v618 = vld [vmem:[#allocation8 + $0x408] sm:$0xff]
    %v619 = vld [vmem:[#allocation8 + $0x410] sm:$0xff]
    %v620 = vld [vmem:[#allocation8 + $0x418] sm:$0xff]
    %v621 = vld [vmem:[#allocation8 + $0x420] sm:$0xff]
    %v622 = vld [vmem:[#allocation8 + $0x428] sm:$0xff]
    %v623 = vld [vmem:[#allocation8 + $0x430] sm:$0xff]
    %v624 = vld [vmem:[#allocation8 + $0x438] sm:$0xff]
    %v625 = vld [vmem:[#allocation8 + $0x440] sm:$0xff]
    %v626 = vld [vmem:[#allocation8 + $0x448] sm:$0xff]
    %v627 = vld [vmem:[#allocation8 + $0x450] sm:$0xff]
    %v628 = vld [vmem:[#allocation8 + $0x458] sm:$0xff]
    %v629 = vld [vmem:[#allocation8 + $0x460] sm:$0xff]
    %v630 = vld [vmem:[#allocation8 + $0x468] sm:$0xff]
    %v631 = vld [vmem:[#allocation8 + $0x470] sm:$0xff]
    %v632 = vld [vmem:[#allocation8 + $0x478] sm:$0xff]
    %v633 = vld [vmem:[#allocation8 + $0x480] sm:$0xff]
    %v634 = vld [vmem:[#allocation8 + $0x488] sm:$0xff]
    %v635 = vld [vmem:[#allocation8 + $0x490] sm:$0xff]
    %v636 = vld [vmem:[#allocation8 + $0x498] sm:$0xff]
    %v637 = vld [vmem:[#allocation8 + $0x4a0] sm:$0xff]
    %v638 = vld [vmem:[#allocation8 + $0x4a8] sm:$0xff]
    %v639 = vld [vmem:[#allocation8 + $0x4b0] sm:$0xff]
    %v640 = vld [vmem:[#allocation8 + $0x4b8] sm:$0xff]
    %v641 = vld [vmem:[#allocation8 + $0x4c0] sm:$0xff]
    %v642 = vld [vmem:[#allocation8 + $0x4c8] sm:$0xff]
    %v643 = vld [vmem:[#allocation8 + $0x4d0] sm:$0xff]
    %v644 = vld [vmem:[#allocation8 + $0x4d8] sm:$0xff]
    %v645 = vld [vmem:[#allocation8 + $0x4e0] sm:$0xff]
    %v646 = vld [vmem:[#allocation8 + $0x4e8] sm:$0xff]
    %v647 = vld [vmem:[#allocation8 + $0x4f0] sm:$0xff]
    %v648 = vld [vmem:[#allocation8 + $0x4f8] sm:$0xff]
    %v649 = vld [vmem:[#allocation8 + $0x500] sm:$0xff]
    %v650 = vld [vmem:[#allocation8 + $0x508] sm:$0xff]
    %v651 = vld [vmem:[#allocation8 + $0x510] sm:$0xff]
    %v652 = vld [vmem:[#allocation8 + $0x518] sm:$0xff]
    %v653 = vld [vmem:[#allocation8 + $0x520] sm:$0xff]
    %v654 = vld [vmem:[#allocation8 + $0x528] sm:$0xff]
    %v655 = vld [vmem:[#allocation8 + $0x530] sm:$0xff]
    %v656 = vld [vmem:[#allocation8 + $0x538] sm:$0xff]
    %v657 = vld [vmem:[#allocation8 + $0x540] sm:$0xff]
    %v658 = vld [vmem:[#allocation8 + $0x548] sm:$0xff]
    %v659 = vld [vmem:[#allocation8 + $0x550] sm:$0xff]
    %v660 = vld [vmem:[#allocation8 + $0x558] sm:$0xff]
    %v661 = vld [vmem:[#allocation8 + $0x560] sm:$0xff]
    %v662 = vld [vmem:[#allocation8 + $0x568] sm:$0xff]
    %v663 = vld [vmem:[#allocation8 + $0x570] sm:$0xff]
    %v664 = vld [vmem:[#allocation8 + $0x578] sm:$0xff]
    %v665 = vld [vmem:[#allocation8 + $0x580] sm:$0xff]
    %v666 = vld [vmem:[#allocation8 + $0x588] sm:$0xff]
    %v667 = vld [vmem:[#allocation8 + $0x590] sm:$0xff]
    %v668 = vld [vmem:[#allocation8 + $0x598] sm:$0xff]
    %v669 = vld [vmem:[#allocation8 + $0x5a0] sm:$0xff]
    %v670 = vld [vmem:[#allocation8 + $0x5a8] sm:$0xff]
    %v671 = vld [vmem:[#allocation8 + $0x5b0] sm:$0xff]
    %v672 = vld [vmem:[#allocation8 + $0x5b8] sm:$0xff]
    %v673 = vld [vmem:[#allocation8 + $0x5c0] sm:$0xff]
    %v674 = vld [vmem:[#allocation8 + $0x5c8] sm:$0xff]
    %v675 = vld [vmem:[#allocation8 + $0x5d0] sm:$0xff]
    %v676 = vld [vmem:[#allocation8 + $0x5d8] sm:$0xff]
    %v677 = vld [vmem:[#allocation8 + $0x5e0] sm:$0xff]
    %v678 = vld [vmem:[#allocation8 + $0x5e8] sm:$0xff]
    %v679 = vld [vmem:[#allocation8 + $0x5f0] sm:$0xff]
    %v680 = vld [vmem:[#allocation8 + $0x5f8] sm:$0xff]
    %v681 = vld [vmem:[#allocation8 + $0x600] sm:$0xff]
    %v682 = vld [vmem:[#allocation8 + $0x608] sm:$0xff]
    %v683 = vld [vmem:[#allocation8 + $0x610] sm:$0xff]
    %v684 = vld [vmem:[#allocation8 + $0x618] sm:$0xff]
    %v685 = vld [vmem:[#allocation8 + $0x620] sm:$0xff]
    %v686 = vld [vmem:[#allocation8 + $0x628] sm:$0xff]
    %v687 = vld [vmem:[#allocation8 + $0x630] sm:$0xff]
    %v688 = vld [vmem:[#allocation8 + $0x638] sm:$0xff]
    %v689 = vld [vmem:[#allocation8 + $0x640] sm:$0xff]
    %v690 = vld [vmem:[#allocation8 + $0x648] sm:$0xff]
    %v691 = vld [vmem:[#allocation8 + $0x650] sm:$0xff]
    %v692 = vld [vmem:[#allocation8 + $0x658] sm:$0xff]
    %v693 = vld [vmem:[#allocation8 + $0x660] sm:$0xff]
    %v694 = vld [vmem:[#allocation8 + $0x668] sm:$0xff]
    %v695 = vld [vmem:[#allocation8 + $0x670] sm:$0xff]
    %v696 = vld [vmem:[#allocation8 + $0x678] sm:$0xff]
    %v697 = vld [vmem:[#allocation8 + $0x680] sm:$0xff]
    %v698 = vld [vmem:[#allocation8 + $0x688] sm:$0xff]
    %v699 = vld [vmem:[#allocation8 + $0x690] sm:$0xff]
    %v700 = vld [vmem:[#allocation8 + $0x698] sm:$0xff]
    %v701 = vld [vmem:[#allocation8 + $0x6a0] sm:$0xff]
    %v702 = vld [vmem:[#allocation8 + $0x6a8] sm:$0xff]
    %v703 = vld [vmem:[#allocation8 + $0x6b0] sm:$0xff]
    %v704 = vld [vmem:[#allocation8 + $0x6b8] sm:$0xff]
    %v705 = vld [vmem:[#allocation8 + $0x6c0] sm:$0xff]
    %v706 = vld [vmem:[#allocation8 + $0x6c8] sm:$0xff]
    %v707 = vld [vmem:[#allocation8 + $0x6d0] sm:$0xff]
    %v708 = vld [vmem:[#allocation8 + $0x6d8] sm:$0xff]
    %v709 = vld [vmem:[#allocation8 + $0x6e0] sm:$0xff]
    %v710 = vld [vmem:[#allocation8 + $0x6e8] sm:$0xff]
    %v711 = vld [vmem:[#allocation8 + $0x6f0] sm:$0xff]
    %v712 = vld [vmem:[#allocation8 + $0x6f8] sm:$0xff]
    %v713 = vld [vmem:[#allocation8 + $0x700] sm:$0xff]
    %v714 = vld [vmem:[#allocation8 + $0x708] sm:$0xff]
    %v715 = vld [vmem:[#allocation8 + $0x710] sm:$0xff]
    %v716 = vld [vmem:[#allocation8 + $0x718] sm:$0xff]
    %v717 = vld [vmem:[#allocation8 + $0x720] sm:$0xff]
    %v718 = vld [vmem:[#allocation8 + $0x728] sm:$0xff]
    %v719 = vld [vmem:[#allocation8 + $0x730] sm:$0xff]
    %v720 = vld [vmem:[#allocation8 + $0x738] sm:$0xff]
    %v721 = vld [vmem:[#allocation8 + $0x740] sm:$0xff]
    %v722 = vld [vmem:[#allocation8 + $0x748] sm:$0xff]
    %v723 = vld [vmem:[#allocation8 + $0x750] sm:$0xff]
    %v724 = vld [vmem:[#allocation8 + $0x758] sm:$0xff]
    %v725 = vld [vmem:[#allocation8 + $0x760] sm:$0xff]
    %v726 = vld [vmem:[#allocation8 + $0x768] sm:$0xff]
    %v727 = vld [vmem:[#allocation8 + $0x770] sm:$0xff]
    %v728 = vld [vmem:[#allocation8 + $0x778] sm:$0xff]
    %v729 = vld [vmem:[#allocation8 + $0x780] sm:$0xff]
    %v730 = vld [vmem:[#allocation8 + $0x788] sm:$0xff]
    %v731 = vld [vmem:[#allocation8 + $0x790] sm:$0xff]
    %v732 = vld [vmem:[#allocation8 + $0x798] sm:$0xff]
    %v733 = vld [vmem:[#allocation8 + $0x7a0] sm:$0xff]
    %v734 = vld [vmem:[#allocation8 + $0x7a8] sm:$0xff]
    %v735 = vld [vmem:[#allocation8 + $0x7b0] sm:$0xff]
    %v736 = vld [vmem:[#allocation8 + $0x7b8] sm:$0xff]
    %v737 = vld [vmem:[#allocation8 + $0x7c0] sm:$0xff]
    %v738 = vld [vmem:[#allocation8 + $0x7c8] sm:$0xff]
    %v739 = vld [vmem:[#allocation8 + $0x7d0] sm:$0xff]
    %v740 = vld [vmem:[#allocation8 + $0x7d8] sm:$0xff]
    %v741 = vld [vmem:[#allocation8 + $0x7e0] sm:$0xff]
    %v742 = vld [vmem:[#allocation8 + $0x7e8] sm:$0xff]
    %v743 = vld [vmem:[#allocation8 + $0x7f0] sm:$0xff]
    %v744 = vld [vmem:[#allocation8 + $0x7f8] sm:$0xff]
    %v1001 = vunpack.c.l.b16 %v489
    %v1002 = vunpack.c.h.b16 %v489
    %v1003 = vunpack.c.l.b16 %v490
    %v1004 = vunpack.c.h.b16 %v490
    %v1005 = vunpack.c.l.b16 %v491
    %v1006 = vunpack.c.h.b16 %v491
    %v1007 = vunpack.c.l.b16 %v492
    %v1008 = vunpack.c.h.b16 %v492
    %v1009 = vunpack.c.l.b16 %v493
    %v1010 = vunpack.c.h.b16 %v493
    %v1011 = vunpack.c.l.b16 %v494
    %v1012 = vunpack.c.h.b16 %v494
    %v1013 = vunpack.c.l.b16 %v495
    %v1014 = vunpack.c.h.b16 %v495
    %v1015 = vunpack.c.l.b16 %v496
    %v1016 = vunpack.c.h.b16 %v496
    %v1017 = vunpack.c.l.b16 %v497
    %v1018 = vunpack.c.h.b16 %v497
    %v1019 = vunpack.c.l.b16 %v498
    %v1020 = vunpack.c.h.b16 %v498
    %v1021 = vunpack.c.l.b16 %v499
    %v1022 = vunpack.c.h.b16 %v499
    %v1023 = vunpack.c.l.b16 %v500
    %v1024 = vunpack.c.h.b16 %v500
    %v1025 = vunpack.c.l.b16 %v501
    %v1026 = vunpack.c.h.b16 %v501
    %v1027 = vunpack.c.l.b16 %v502
    %v1028 = vunpack.c.h.b16 %v502
    %v1029 = vunpack.c.l.b16 %v503
    %v1030 = vunpack.c.h.b16 %v503
    %v1031 = vunpack.c.l.b16 %v504
    %v1032 = vunpack.c.h.b16 %v504
    %v1033 = vunpack.c.l.b16 %v505
    %v1034 = vunpack.c.h.b16 %v505
    %v1035 = vunpack.c.l.b16 %v506
    %v1036 = vunpack.c.h.b16 %v506
    %v1037 = vunpack.c.l.b16 %v507
    %v1038 = vunpack.c.h.b16 %v507
    %v1039 = vunpack.c.l.b16 %v508
    %v1040 = vunpack.c.h.b16 %v508
    %v1041 = vunpack.c.l.b16 %v509
    %v1042 = vunpack.c.h.b16 %v509
    %v1043 = vunpack.c.l.b16 %v510
    %v1044 = vunpack.c.h.b16 %v510
    %v1045 = vunpack.c.l.b16 %v511
    %v1046 = vunpack.c.h.b16 %v511
    %v1047 = vunpack.c.l.b16 %v512
    %v1048 = vunpack.c.h.b16 %v512
    %v1049 = vunpack.c.l.b16 %v513
    %v1050 = vunpack.c.h.b16 %v513
    %v1051 = vunpack.c.l.b16 %v514
    %v1052 = vunpack.c.h.b16 %v514
    %v1053 = vunpack.c.l.b16 %v515
    %v1054 = vunpack.c.h.b16 %v515
    %v1055 = vunpack.c.l.b16 %v516
    %v1056 = vunpack.c.h.b16 %v516
    %v1057 = vunpack.c.l.b16 %v517
    %v1058 = vunpack.c.h.b16 %v517
    %v1059 = vunpack.c.l.b16 %v518
    %v1060 = vunpack.c.h.b16 %v518
    %v1061 = vunpack.c.l.b16 %v519
    %v1062 = vunpack.c.h.b16 %v519
    %v1063 = vunpack.c.l.b16 %v520
    %v1064 = vunpack.c.h.b16 %v520
    %v1065 = vunpack.c.l.b16 %v521
    %v1066 = vunpack.c.h.b16 %v521
    %v1067 = vunpack.c.l.b16 %v522
    %v1068 = vunpack.c.h.b16 %v522
    %v1069 = vunpack.c.l.b16 %v523
    %v1070 = vunpack.c.h.b16 %v523
    %v1071 = vunpack.c.l.b16 %v524
    %v1072 = vunpack.c.h.b16 %v524
    %v1073 = vunpack.c.l.b16 %v525
    %v1074 = vunpack.c.h.b16 %v525
    %v1075 = vunpack.c.l.b16 %v526
    %v1076 = vunpack.c.h.b16 %v526
    %v1077 = vunpack.c.l.b16 %v527
    %v1078 = vunpack.c.h.b16 %v527
    %v1079 = vunpack.c.l.b16 %v528
    %v1080 = vunpack.c.h.b16 %v528
    %v1081 = vunpack.c.l.b16 %v529
    %v1082 = vunpack.c.h.b16 %v529
    %v1083 = vunpack.c.l.b16 %v530
    %v1084 = vunpack.c.h.b16 %v530
    %v1085 = vunpack.c.l.b16 %v531
    %v1086 = vunpack.c.h.b16 %v531
    %v1087 = vunpack.c.l.b16 %v532
    %v1088 = vunpack.c.h.b16 %v532
    %v1089 = vunpack.c.l.b16 %v533
    %v1090 = vunpack.c.h.b16 %v533
    %v1091 = vunpack.c.l.b16 %v534
    %v1092 = vunpack.c.h.b16 %v534
    %v1093 = vunpack.c.l.b16 %v535
    %v1094 = vunpack.c.h.b16 %v535
    %v1095 = vunpack.c.l.b16 %v536
    %v1096 = vunpack.c.h.b16 %v536
    %v1097 = vunpack.c.l.b16 %v537
    %v1098 = vunpack.c.h.b16 %v537
    %v1099 = vunpack.c.l.b16 %v538
    %v1100 = vunpack.c.h.b16 %v538
    %v1101 = vunpack.c.l.b16 %v539
    %v1102 = vunpack.c.h.b16 %v539
    %v1103 = vunpack.c.l.b16 %v540
    %v1104 = vunpack.c.h.b16 %v540
    %v1105 = vunpack.c.l.b16 %v541
    %v1106 = vunpack.c.h.b16 %v541
    %v1107 = vunpack.c.l.b16 %v542
    %v1108 = vunpack.c.h.b16 %v542
    %v1109 = vunpack.c.l.b16 %v543
    %v1110 = vunpack.c.h.b16 %v543
    %v1111 = vunpack.c.l.b16 %v544
    %v1112 = vunpack.c.h.b16 %v544
    %v1113 = vunpack.c.l.b16 %v545
    %v1114 = vunpack.c.h.b16 %v545
    %v1115 = vunpack.c.l.b16 %v546
    %v1116 = vunpack.c.h.b16 %v546
    %v1117 = vunpack.c.l.b16 %v547
    %v1118 = vunpack.c.h.b16 %v547
    %v1119 = vunpack.c.l.b16 %v548
    %v1120 = vunpack.c.h.b16 %v548
    %v1121 = vunpack.c.l.b16 %v549
    %v1122 = vunpack.c.h.b16 %v549
    %v1123 = vunpack.c.l.b16 %v550
    %v1124 = vunpack.c.h.b16 %v550
    %v1125 = vunpack.c.l.b16 %v551
    %v1126 = vunpack.c.h.b16 %v551
    %v1127 = vunpack.c.l.b16 %v552
    %v1128 = vunpack.c.h.b16 %v552
    %v1129 = vunpack.c.l.b16 %v553
    %v1130 = vunpack.c.h.b16 %v553
    %v1131 = vunpack.c.l.b16 %v554
    %v1132 = vunpack.c.h.b16 %v554
    %v1133 = vunpack.c.l.b16 %v555
    %v1134 = vunpack.c.h.b16 %v555
    %v1135 = vunpack.c.l.b16 %v556
    %v1136 = vunpack.c.h.b16 %v556
    %v1137 = vunpack.c.l.b16 %v557
    %v1138 = vunpack.c.h.b16 %v557
    %v1139 = vunpack.c.l.b16 %v558
    %v1140 = vunpack.c.h.b16 %v558
    %v1141 = vunpack.c.l.b16 %v559
    %v1142 = vunpack.c.h.b16 %v559
    %v1143 = vunpack.c.l.b16 %v560
    %v1144 = vunpack.c.h.b16 %v560
    %v1145 = vunpack.c.l.b16 %v561
    %v1146 = vunpack.c.h.b16 %v561
    %v1147 = vunpack.c.l.b16 %v562
    %v1148 = vunpack.c.h.b16 %v562
    %v1149 = vunpack.c.l.b16 %v563
    %v1150 = vunpack.c.h.b16 %v563
    %v1151 = vunpack.c.l.b16 %v564
    %v1152 = vunpack.c.h.b16 %v564
    %v1153 = vunpack.c.l.b16 %v565
    %v1154 = vunpack.c.h.b16 %v565
    %v1155 = vunpack.c.l.b16 %v566
    %v1156 = vunpack.c.h.b16 %v566
    %v1157 = vunpack.c.l.b16 %v567
    %v1158 = vunpack.c.h.b16 %v567
    %v1159 = vunpack.c.l.b16 %v568
    %v1160 = vunpack.c.h.b16 %v568
    %v1161 = vunpack.c.l.b16 %v569
    %v1162 = vunpack.c.h.b16 %v569
    %v1163 = vunpack.c.l.b16 %v570
    %v1164 = vunpack.c.h.b16 %v570
    %v1165 = vunpack.c.l.b16 %v571
    %v1166 = vunpack.c.h.b16 %v571
    %v1167 = vunpack.c.l.b16 %v572
    %v1168 = vunpack.c.h.b16 %v572
    %v1169 = vunpack.c.l.b16 %v573
    %v1170 = vunpack.c.h.b16 %v573
    %v1171 = vunpack.c.l.b16 %v574
    %v1172 = vunpack.c.h.b16 %v574
    %v1173 = vunpack.c.l.b16 %v575
    %v1174 = vunpack.c.h.b16 %v575
    %v1175 = vunpack.c.l.b16 %v576
    %v1176 = vunpack.c.h.b16 %v576
    %v1177 = vunpack.c.l.b16 %v577
    %v1178 = vunpack.c.h.b16 %v577
    %v1179 = vunpack.c.l.b16 %v578
    %v1180 = vunpack.c.h.b16 %v578
    %v1181 = vunpack.c.l.b16 %v579
    %v1182 = vunpack.c.h.b16 %v579
    %v1183 = vunpack.c.l.b16 %v580
    %v1184 = vunpack.c.h.b16 %v580
    %v1185 = vunpack.c.l.b16 %v581
    %v1186 = vunpack.c.h.b16 %v581
    %v1187 = vunpack.c.l.b16 %v582
    %v1188 = vunpack.c.h.b16 %v582
    %v1189 = vunpack.c.l.b16 %v583
    %v1190 = vunpack.c.h.b16 %v583
    %v1191 = vunpack.c.l.b16 %v584
    %v1192 = vunpack.c.h.b16 %v584
    %v1193 = vunpack.c.l.b16 %v585
    %v1194 = vunpack.c.h.b16 %v585
    %v1195 = vunpack.c.l.b16 %v586
    %v1196 = vunpack.c.h.b16 %v586
    %v1197 = vunpack.c.l.b16 %v587
    %v1198 = vunpack.c.h.b16 %v587
    %v1199 = vunpack.c.l.b16 %v588
    %v1200 = vunpack.c.h.b16 %v588
    %v1201 = vunpack.c.l.b16 %v589
    %v1202 = vunpack.c.h.b16 %v589
    %v1203 = vunpack.c.l.b16 %v590
    %v1204 = vunpack.c.h.b16 %v590
    %v1205 = vunpack.c.l.b16 %v591
    %v1206 = vunpack.c.h.b16 %v591
    %v1207 = vunpack.c.l.b16 %v592
    %v1208 = vunpack.c.h.b16 %v592
    %v1209 = vunpack.c.l.b16 %v593
    %v1210 = vunpack.c.h.b16 %v593
    %v1211 = vunpack.c.l.b16 %v594
    %v1212 = vunpack.c.h.b16 %v594
    %v1213 = vunpack.c.l.b16 %v595
    %v1214 = vunpack.c.h.b16 %v595
    %v1215 = vunpack.c.l.b16 %v596
    %v1216 = vunpack.c.h.b16 %v596
    %v1217 = vunpack.c.l.b16 %v597
    %v1218 = vunpack.c.h.b16 %v597
    %v1219 = vunpack.c.l.b16 %v598
    %v1220 = vunpack.c.h.b16 %v598
    %v1221 = vunpack.c.l.b16 %v599
    %v1222 = vunpack.c.h.b16 %v599
    %v1223 = vunpack.c.l.b16 %v600
    %v1224 = vunpack.c.h.b16 %v600
    %v1225 = vunpack.c.l.b16 %v601
    %v1226 = vunpack.c.h.b16 %v601
    %v1227 = vunpack.c.l.b16 %v602
    %v1228 = vunpack.c.h.b16 %v602
    %v1229 = vunpack.c.l.b16 %v603
    %v1230 = vunpack.c.h.b16 %v603
    %v1231 = vunpack.c.l.b16 %v604
    %v1232 = vunpack.c.h.b16 %v604
    %v1233 = vunpack.c.l.b16 %v605
    %v1234 = vunpack.c.h.b16 %v605
    %v1235 = vunpack.c.l.b16 %v606
    %v1236 = vunpack.c.h.b16 %v606
    %v1237 = vunpack.c.l.b16 %v607
    %v1238 = vunpack.c.h.b16 %v607
    %v1239 = vunpack.c.l.b16 %v608
    %v1240 = vunpack.c.h.b16 %v608
    %v1241 = vunpack.c.l.b16 %v609
    %v1242 = vunpack.c.h.b16 %v609
    %v1243 = vunpack.c.l.b16 %v610
    %v1244 = vunpack.c.h.b16 %v610
    %v1245 = vunpack.c.l.b16 %v611
    %v1246 = vunpack.c.h.b16 %v611
    %v1247 = vunpack.c.l.b16 %v612
    %v1248 = vunpack.c.h.b16 %v612
    %v1249 = vunpack.c.l.b16 %v613
    %v1250 = vunpack.c.h.b16 %v613
    %v1251 = vunpack.c.l.b16 %v614
    %v1252 = vunpack.c.h.b16 %v614
    %v1253 = vunpack.c.l.b16 %v615
    %v1254 = vunpack.c.h.b16 %v615
    %v1255 = vunpack.c.l.b16 %v616
    %v1256 = vunpack.c.h.b16 %v616
    %v1257 = vunpack.c.l.b16 %v617
    %v1258 = vunpack.c.h.b16 %v617
    %v1259 = vunpack.c.l.b16 %v618
    %v1260 = vunpack.c.h.b16 %v618
    %v1261 = vunpack.c.l.b16 %v619
    %v1262 = vunpack.c.h.b16 %v619
    %v1263 = vunpack.c.l.b16 %v620
    %v1264 = vunpack.c.h.b16 %v620
    %v1265 = vunpack.c.l.b16 %v621
    %v1266 = vunpack.c.h.b16 %v621
    %v1267 = vunpack.c.l.b16 %v622
    %v1268 = vunpack.c.h.b16 %v622
    %v1269 = vunpack.c.l.b16 %v623
    %v1270 = vunpack.c.h.b16 %v623
    %v1271 = vunpack.c.l.b16 %v624
    %v1272 = vunpack.c.h.b16 %v624
    %v1273 = vunpack.c.l.b16 %v625
    %v1274 = vunpack.c.h.b16 %v625
    %v1275 = vunpack.c.l.b16 %v626
    %v1276 = vunpack.c.h.b16 %v626
    %v1277 = vunpack.c.l.b16 %v627
    %v1278 = vunpack.c.h.b16 %v627
    %v1279 = vunpack.c.l.b16 %v628
    %v1280 = vunpack.c.h.b16 %v628
    %v1281 = vunpack.c.l.b16 %v629
    %v1282 = vunpack.c.h.b16 %v629
    %v1283 = vunpack.c.l.b16 %v630
    %v1284 = vunpack.c.h.b16 %v630
    %v1285 = vunpack.c.l.b16 %v631
    %v1286 = vunpack.c.h.b16 %v631
    %v1287 = vunpack.c.l.b16 %v632
    %v1288 = vunpack.c.h.b16 %v632
    %v1289 = vunpack.c.l.b16 %v633
    %v1290 = vunpack.c.h.b16 %v633
    %v1291 = vunpack.c.l.b16 %v634
    %v1292 = vunpack.c.h.b16 %v634
    %v1293 = vunpack.c.l.b16 %v635
    %v1294 = vunpack.c.h.b16 %v635
    %v1295 = vunpack.c.l.b16 %v636
    %v1296 = vunpack.c.h.b16 %v636
    %v1297 = vunpack.c.l.b16 %v637
    %v1298 = vunpack.c.h.b16 %v637
    %v1299 = vunpack.c.l.b16 %v638
    %v1300 = vunpack.c.h.b16 %v638
    %v1301 = vunpack.c.l.b16 %v639
    %v1302 = vunpack.c.h.b16 %v639
    %v1303 = vunpack.c.l.b16 %v640
    %v1304 = vunpack.c.h.b16 %v640
    %v1305 = vunpack.c.l.b16 %v641
    %v1306 = vunpack.c.h.b16 %v641
    %v1307 = vunpack.c.l.b16 %v642
    %v1308 = vunpack.c.h.b16 %v642
    %v1309 = vunpack.c.l.b16 %v643
    %v1310 = vunpack.c.h.b16 %v643
    %v1311 = vunpack.c.l.b16 %v644
    %v1312 = vunpack.c.h.b16 %v644
    %v1313 = vunpack.c.l.b16 %v645
    %v1314 = vunpack.c.h.b16 %v645
    %v1315 = vunpack.c.l.b16 %v646
    %v1316 = vunpack.c.h.b16 %v646
    %v1317 = vunpack.c.l.b16 %v647
    %v1318 = vunpack.c.h.b16 %v647
    %v1319 = vunpack.c.l.b16 %v648
    %v1320 = vunpack.c.h.b16 %v648
    %v1321 = vunpack.c.l.b16 %v649
    %v1322 = vunpack.c.h.b16 %v649
    %v1323 = vunpack.c.l.b16 %v650
    %v1324 = vunpack.c.h.b16 %v650
    %v1325 = vunpack.c.l.b16 %v651
    %v1326 = vunpack.c.h.b16 %v651
    %v1327 = vunpack.c.l.b16 %v652
    %v1328 = vunpack.c.h.b16 %v652
    %v1329 = vunpack.c.l.b16 %v653
    %v1330 = vunpack.c.h.b16 %v653
    %v1331 = vunpack.c.l.b16 %v654
    %v1332 = vunpack.c.h.b16 %v654
    %v1333 = vunpack.c.l.b16 %v655
    %v1334 = vunpack.c.h.b16 %v655
    %v1335 = vunpack.c.l.b16 %v656
    %v1336 = vunpack.c.h.b16 %v656
    %v1337 = vunpack.c.l.b16 %v657
    %v1338 = vunpack.c.h.b16 %v657
    %v1339 = vunpack.c.l.b16 %v658
    %v1340 = vunpack.c.h.b16 %v658
    %v1341 = vunpack.c.l.b16 %v659
    %v1342 = vunpack.c.h.b16 %v659
    %v1343 = vunpack.c.l.b16 %v660
    %v1344 = vunpack.c.h.b16 %v660
    %v1345 = vunpack.c.l.b16 %v661
    %v1346 = vunpack.c.h.b16 %v661
    %v1347 = vunpack.c.l.b16 %v662
    %v1348 = vunpack.c.h.b16 %v662
    %v1349 = vunpack.c.l.b16 %v663
    %v1350 = vunpack.c.h.b16 %v663
    %v1351 = vunpack.c.l.b16 %v664
    %v1352 = vunpack.c.h.b16 %v664
    %v1353 = vunpack.c.l.b16 %v665
    %v1354 = vunpack.c.h.b16 %v665
    %v1355 = vunpack.c.l.b16 %v666
    %v1356 = vunpack.c.h.b16 %v666
    %v1357 = vunpack.c.l.b16 %v667
    %v1358 = vunpack.c.h.b16 %v667
    %v1359 = vunpack.c.l.b16 %v668
    %v1360 = vunpack.c.h.b16 %v668
    %v1361 = vunpack.c.l.b16 %v669
    %v1362 = vunpack.c.h.b16 %v669
    %v1363 = vunpack.c.l.b16 %v670
    %v1364 = vunpack.c.h.b16 %v670
    %v1365 = vunpack.c.l.b16 %v671
    %v1366 = vunpack.c.h.b16 %v671
    %v1367 = vunpack.c.l.b16 %v672
    %v1368 = vunpack.c.h.b16 %v672
    %v1369 = vunpack.c.l.b16 %v673
    %v1370 = vunpack.c.h.b16 %v673
    %v1371 = vunpack.c.l.b16 %v674
    %v1372 = vunpack.c.h.b16 %v674
    %v1373 = vunpack.c.l.b16 %v675
    %v1374 = vunpack.c.h.b16 %v675
    %v1375 = vunpack.c.l.b16 %v676
    %v1376 = vunpack.c.h.b16 %v676
    %v1377 = vunpack.c.l.b16 %v677
    %v1378 = vunpack.c.h.b16 %v677
    %v1379 = vunpack.c.l.b16 %v678
    %v1380 = vunpack.c.h.b16 %v678
    %v1381 = vunpack.c.l.b16 %v679
    %v1382 = vunpack.c.h.b16 %v679
    %v1383 = vunpack.c.l.b16 %v680
    %v1384 = vunpack.c.h.b16 %v680
    %v1385 = vunpack.c.l.b16 %v681
    %v1386 = vunpack.c.h.b16 %v681
    %v1387 = vunpack.c.l.b16 %v682
    %v1388 = vunpack.c.h.b16 %v682
    %v1389 = vunpack.c.l.b16 %v683
    %v1390 = vunpack.c.h.b16 %v683
    %v1391 = vunpack.c.l.b16 %v684
    %v1392 = vunpack.c.h.b16 %v684
    %v1393 = vunpack.c.l.b16 %v685
    %v1394 = vunpack.c.h.b16 %v685
    %v1395 = vunpack.c.l.b16 %v686
    %v1396 = vunpack.c.h.b16 %v686
    %v1397 = vunpack.c.l.b16 %v687
    %v1398 = vunpack.c.h.b16 %v687
    %v1399 = vunpack.c.l.b16 %v688
    %v1400 = vunpack.c.h.b16 %v688
    %v1401 = vunpack.c.l.b16 %v689
    %v1402 = vunpack.c.h.b16 %v689
    %v1403 = vunpack.c.l.b16 %v690
    %v1404 = vunpack.c.h.b16 %v690
    %v1405 = vunpack.c.l.b16 %v691
    %v1406 = vunpack.c.h.b16 %v691
    %v1407 = vunpack.c.l.b16 %v692
    %v1408 = vunpack.c.h.b16 %v692
    %v1409 = vunpack.c.l.b16 %v693
    %v1410 = vunpack.c.h.b16 %v693
    %v1411 = vunpack.c.l.b16 %v694
    %v1412 = vunpack.c.h.b16 %v694
    %v1413 = vunpack.c.l.b16 %v695
    %v1414 = vunpack.c.h.b16 %v695
    %v1415 = vunpack.c.l.b16 %v696
    %v1416 = vunpack.c.h.b16 %v696
    %v1417 = vunpack.c.l.b16 %v697
    %v1418 = vunpack.c.h.b16 %v697
    %v1419 = vunpack.c.l.b16 %v698
    %v1420 = vunpack.c.h.b16 %v698
    %v1421 = vunpack.c.l.b16 %v699
    %v1422 = vunpack.c.h.b16 %v699
    %v1423 = vunpack.c.l.b16 %v700
    %v1424 = vunpack.c.h.b16 %v700
    %v1425 = vunpack.c.l.b16 %v701
    %v1426 = vunpack.c.h.b16 %v701
    %v1427 = vunpack.c.l.b16 %v702
    %v1428 = vunpack.c.h.b16 %v702
    %v1429 = vunpack.c.l.b16 %v703
    %v1430 = vunpack.c.h.b16 %v703
    %v1431 = vunpack.c.l.b16 %v704
    %v1432 = vunpack.c.h.b16 %v704
    %v1433 = vunpack.c.l.b16 %v705
    %v1434 = vunpack.c.h.b16 %v705
    %v1435 = vunpack.c.l.b16 %v706
    %v1436 = vunpack.c.h.b16 %v706
    %v1437 = vunpack.c.l.b16 %v707
    %v1438 = vunpack.c.h.b16 %v707
    %v1439 = vunpack.c.l.b16 %v708
    %v1440 = vunpack.c.h.b16 %v708
    %v1441 = vunpack.c.l.b16 %v709
    %v1442 = vunpack.c.h.b16 %v709
    %v1443 = vunpack.c.l.b16 %v710
    %v1444 = vunpack.c.h.b16 %v710
    %v1445 = vunpack.c.l.b16 %v711
    %v1446 = vunpack.c.h.b16 %v711
    %v1447 = vunpack.c.l.b16 %v712
    %v1448 = vunpack.c.h.b16 %v712
    %v1449 = vunpack.c.l.b16 %v713
    %v1450 = vunpack.c.h.b16 %v713
    %v1451 = vunpack.c.l.b16 %v714
    %v1452 = vunpack.c.h.b16 %v714
    %v1453 = vunpack.c.l.b16 %v715
    %v1454 = vunpack.c.h.b16 %v715
    %v1455 = vunpack.c.l.b16 %v716
    %v1456 = vunpack.c.h.b16 %v716
    %v1457 = vunpack.c.l.b16 %v717
    %v1458 = vunpack.c.h.b16 %v717
    %v1459 = vunpack.c.l.b16 %v718
    %v1460 = vunpack.c.h.b16 %v718
    %v1461 = vunpack.c.l.b16 %v719
    %v1462 = vunpack.c.h.b16 %v719
    %v1463 = vunpack.c.l.b16 %v720
    %v1464 = vunpack.c.h.b16 %v720
    %v1465 = vunpack.c.l.b16 %v721
    %v1466 = vunpack.c.h.b16 %v721
    %v1467 = vunpack.c.l.b16 %v722
    %v1468 = vunpack.c.h.b16 %v722
    %v1469 = vunpack.c.l.b16 %v723
    %v1470 = vunpack.c.h.b16 %v723
    %v1471 = vunpack.c.l.b16 %v724
    %v1472 = vunpack.c.h.b16 %v724
    %v1473 = vunpack.c.l.b16 %v725
    %v1474 = vunpack.c.h.b16 %v725
    %v1475 = vunpack.c.l.b16 %v726
    %v1476 = vunpack.c.h.b16 %v726
    %v1477 = vunpack.c.l.b16 %v727
    %v1478 = vunpack.c.h.b16 %v727
    %v1479 = vunpack.c.l.b16 %v728
    %v1480 = vunpack.c.h.b16 %v728
    %v1481 = vunpack.c.l.b16 %v729
    %v1482 = vunpack.c.h.b16 %v729
    %v1483 = vunpack.c.l.b16 %v730
    %v1484 = vunpack.c.h.b16 %v730
    %v1485 = vunpack.c.l.b16 %v731
    %v1486 = vunpack.c.h.b16 %v731
    %v1487 = vunpack.c.l.b16 %v732
    %v1488 = vunpack.c.h.b16 %v732
    %v1489 = vunpack.c.l.b16 %v733
    %v1490 = vunpack.c.h.b16 %v733
    %v1491 = vunpack.c.l.b16 %v734
    %v1492 = vunpack.c.h.b16 %v734
    %v1493 = vunpack.c.l.b16 %v735
    %v1494 = vunpack.c.h.b16 %v735
    %v1495 = vunpack.c.l.b16 %v736
    %v1496 = vunpack.c.h.b16 %v736
    %v1497 = vunpack.c.l.b16 %v737
    %v1498 = vunpack.c.h.b16 %v737
    %v1499 = vunpack.c.l.b16 %v738
    %v1500 = vunpack.c.h.b16 %v738
    %v1501 = vunpack.c.l.b16 %v739
    %v1502 = vunpack.c.h.b16 %v739
    %v1503 = vunpack.c.l.b16 %v740
    %v1504 = vunpack.c.h.b16 %v740
    %v1505 = vunpack.c.l.b16 %v741
    %v1506 = vunpack.c.h.b16 %v741
    %v1507 = vunpack.c.l.b16 %v742
    %v1508 = vunpack.c.h.b16 %v742
    %v1509 = vunpack.c.l.b16 %v743
    %v1510 = vunpack.c.h.b16 %v743
    %v1511 = vunpack.c.l.b16 %v744
    %v1512 = vunpack.c.h.b16 %v744
    %v1513 = vpack.c.b16 %v1005, %v1001
    %v1514 = vpack.c.b16 %v1006, %v1002
    %v1515 = vpack.c.b16 %v1007, %v1003
    %v1516 = vpack.c.b16 %v1008, %v1004
    %v1517 = vpack.c.b16 %v1013, %v1009
    %v1518 = vpack.c.b16 %v1014, %v1010
    %v1519 = vpack.c.b16 %v1015, %v1011
    %v1520 = vpack.c.b16 %v1016, %v1012
    %v1521 = vpack.c.b16 %v1021, %v1017
    %v1522 = vpack.c.b16 %v1022, %v1018
    %v1523 = vpack.c.b16 %v1023, %v1019
    %v1524 = vpack.c.b16 %v1024, %v1020
    %v1525 = vpack.c.b16 %v1029, %v1025
    %v1526 = vpack.c.b16 %v1030, %v1026
    %v1527 = vpack.c.b16 %v1031, %v1027
    %v1528 = vpack.c.b16 %v1032, %v1028
    %v1529 = vpack.c.b16 %v1037, %v1033
    %v1530 = vpack.c.b16 %v1038, %v1034
    %v1531 = vpack.c.b16 %v1039, %v1035
    %v1532 = vpack.c.b16 %v1040, %v1036
    %v1533 = vpack.c.b16 %v1045, %v1041
    %v1534 = vpack.c.b16 %v1046, %v1042
    %v1535 = vpack.c.b16 %v1047, %v1043
    %v1536 = vpack.c.b16 %v1048, %v1044
    %v1537 = vpack.c.b16 %v1053, %v1049
    %v1538 = vpack.c.b16 %v1054, %v1050
    %v1539 = vpack.c.b16 %v1055, %v1051
    %v1540 = vpack.c.b16 %v1056, %v1052
    %v1541 = vpack.c.b16 %v1061, %v1057
    %v1542 = vpack.c.b16 %v1062, %v1058
    %v1543 = vpack.c.b16 %v1063, %v1059
    %v1544 = vpack.c.b16 %v1064, %v1060
    %v1545 = vpack.c.b16 %v1069, %v1065
    %v1546 = vpack.c.b16 %v1070, %v1066
    %v1547 = vpack.c.b16 %v1071, %v1067
    %v1548 = vpack.c.b16 %v1072, %v1068
    %v1549 = vpack.c.b16 %v1077, %v1073
    %v1550 = vpack.c.b16 %v1078, %v1074
    %v1551 = vpack.c.b16 %v1079, %v1075
    %v1552 = vpack.c.b16 %v1080, %v1076
    %v1553 = vpack.c.b16 %v1085, %v1081
    %v1554 = vpack.c.b16 %v1086, %v1082
    %v1555 = vpack.c.b16 %v1087, %v1083
    %v1556 = vpack.c.b16 %v1088, %v1084
    %v1557 = vpack.c.b16 %v1093, %v1089
    %v1558 = vpack.c.b16 %v1094, %v1090
    %v1559 = vpack.c.b16 %v1095, %v1091
    %v1560 = vpack.c.b16 %v1096, %v1092
    %v1561 = vpack.c.b16 %v1101, %v1097
    %v1562 = vpack.c.b16 %v1102, %v1098
    %v1563 = vpack.c.b16 %v1103, %v1099
    %v1564 = vpack.c.b16 %v1104, %v1100
    %v1565 = vpack.c.b16 %v1109, %v1105
    %v1566 = vpack.c.b16 %v1110, %v1106
    %v1567 = vpack.c.b16 %v1111, %v1107
    %v1568 = vpack.c.b16 %v1112, %v1108
    %v1569 = vpack.c.b16 %v1117, %v1113
    %v1570 = vpack.c.b16 %v1118, %v1114
    %v1571 = vpack.c.b16 %v1119, %v1115
    %v1572 = vpack.c.b16 %v1120, %v1116
    %v1573 = vpack.c.b16 %v1125, %v1121
    %v1574 = vpack.c.b16 %v1126, %v1122
    %v1575 = vpack.c.b16 %v1127, %v1123
    %v1576 = vpack.c.b16 %v1128, %v1124
    %v1577 = vpack.c.b16 %v1133, %v1129
    %v1578 = vpack.c.b16 %v1134, %v1130
    %v1579 = vpack.c.b16 %v1135, %v1131
    %v1580 = vpack.c.b16 %v1136, %v1132
    %v1581 = vpack.c.b16 %v1141, %v1137
    %v1582 = vpack.c.b16 %v1142, %v1138
    %v1583 = vpack.c.b16 %v1143, %v1139
    %v1584 = vpack.c.b16 %v1144, %v1140
    %v1585 = vpack.c.b16 %v1149, %v1145
    %v1586 = vpack.c.b16 %v1150, %v1146
    %v1587 = vpack.c.b16 %v1151, %v1147
    %v1588 = vpack.c.b16 %v1152, %v1148
    %v1589 = vpack.c.b16 %v1157, %v1153
    %v1590 = vpack.c.b16 %v1158, %v1154
    %v1591 = vpack.c.b16 %v1159, %v1155
    %v1592 = vpack.c.b16 %v1160, %v1156
    %v1593 = vpack.c.b16 %v1165, %v1161
    %v1594 = vpack.c.b16 %v1166, %v1162
    %v1595 = vpack.c.b16 %v1167, %v1163
    %v1596 = vpack.c.b16 %v1168, %v1164
    %v1597 = vpack.c.b16 %v1173, %v1169
    %v1598 = vpack.c.b16 %v1174, %v1170
    %v1599 = vpack.c.b16 %v1175, %v1171
    %v1600 = vpack.c.b16 %v1176, %v1172
    %v1601 = vpack.c.b16 %v1181, %v1177
    %v1602 = vpack.c.b16 %v1182, %v1178
    %v1603 = vpack.c.b16 %v1183, %v1179
    %v1604 = vpack.c.b16 %v1184, %v1180
    %v1605 = vpack.c.b16 %v1189, %v1185
    %v1606 = vpack.c.b16 %v1190, %v1186
    %v1607 = vpack.c.b16 %v1191, %v1187
    %v1608 = vpack.c.b16 %v1192, %v1188
    %v1609 = vpack.c.b16 %v1197, %v1193
    %v1610 = vpack.c.b16 %v1198, %v1194
    %v1611 = vpack.c.b16 %v1199, %v1195
    %v1612 = vpack.c.b16 %v1200, %v1196
    %v1613 = vpack.c.b16 %v1205, %v1201
    %v1614 = vpack.c.b16 %v1206, %v1202
    %v1615 = vpack.c.b16 %v1207, %v1203
    %v1616 = vpack.c.b16 %v1208, %v1204
    %v1617 = vpack.c.b16 %v1213, %v1209
    %v1618 = vpack.c.b16 %v1214, %v1210
    %v1619 = vpack.c.b16 %v1215, %v1211
    %v1620 = vpack.c.b16 %v1216, %v1212
    %v1621 = vpack.c.b16 %v1221, %v1217
    %v1622 = vpack.c.b16 %v1222, %v1218
    %v1623 = vpack.c.b16 %v1223, %v1219
    %v1624 = vpack.c.b16 %v1224, %v1220
    %v1625 = vpack.c.b16 %v1229, %v1225
    %v1626 = vpack.c.b16 %v1230, %v1226
    %v1627 = vpack.c.b16 %v1231, %v1227
    %v1628 = vpack.c.b16 %v1232, %v1228
    %v1629 = vpack.c.b16 %v1237, %v1233
    %v1630 = vpack.c.b16 %v1238, %v1234
    %v1631 = vpack.c.b16 %v1239, %v1235
    %v1632 = vpack.c.b16 %v1240, %v1236
    %v1633 = vpack.c.b16 %v1245, %v1241
    %v1634 = vpack.c.b16 %v1246, %v1242
    %v1635 = vpack.c.b16 %v1247, %v1243
    %v1636 = vpack.c.b16 %v1248, %v1244
    %v1637 = vpack.c.b16 %v1253, %v1249
    %v1638 = vpack.c.b16 %v1254, %v1250
    %v1639 = vpack.c.b16 %v1255, %v1251
    %v1640 = vpack.c.b16 %v1256, %v1252
    %v1641 = vpack.c.b16 %v1261, %v1257
    %v1642 = vpack.c.b16 %v1262, %v1258
    %v1643 = vpack.c.b16 %v1263, %v1259
    %v1644 = vpack.c.b16 %v1264, %v1260
    %v1645 = vpack.c.b16 %v1269, %v1265
    %v1646 = vpack.c.b16 %v1270, %v1266
    %v1647 = vpack.c.b16 %v1271, %v1267
    %v1648 = vpack.c.b16 %v1272, %v1268
    %v1649 = vpack.c.b16 %v1277, %v1273
    %v1650 = vpack.c.b16 %v1278, %v1274
    %v1651 = vpack.c.b16 %v1279, %v1275
    %v1652 = vpack.c.b16 %v1280, %v1276
    %v1653 = vpack.c.b16 %v1285, %v1281
    %v1654 = vpack.c.b16 %v1286, %v1282
    %v1655 = vpack.c.b16 %v1287, %v1283
    %v1656 = vpack.c.b16 %v1288, %v1284
    %v1657 = vpack.c.b16 %v1293, %v1289
    %v1658 = vpack.c.b16 %v1294, %v1290
    %v1659 = vpack.c.b16 %v1295, %v1291
    %v1660 = vpack.c.b16 %v1296, %v1292
    %v1661 = vpack.c.b16 %v1301, %v1297
    %v1662 = vpack.c.b16 %v1302, %v1298
    %v1663 = vpack.c.b16 %v1303, %v1299
    %v1664 = vpack.c.b16 %v1304, %v1300
    %v1665 = vpack.c.b16 %v1309, %v1305
    %v1666 = vpack.c.b16 %v1310, %v1306
    %v1667 = vpack.c.b16 %v1311, %v1307
    %v1668 = vpack.c.b16 %v1312, %v1308
    %v1669 = vpack.c.b16 %v1317, %v1313
    %v1670 = vpack.c.b16 %v1318, %v1314
    %v1671 = vpack.c.b16 %v1319, %v1315
    %v1672 = vpack.c.b16 %v1320, %v1316
    %v1673 = vpack.c.b16 %v1325, %v1321
    %v1674 = vpack.c.b16 %v1326, %v1322
    %v1675 = vpack.c.b16 %v1327, %v1323
    %v1676 = vpack.c.b16 %v1328, %v1324
    %v1677 = vpack.c.b16 %v1333, %v1329
    %v1678 = vpack.c.b16 %v1334, %v1330
    %v1679 = vpack.c.b16 %v1335, %v1331
    %v1680 = vpack.c.b16 %v1336, %v1332
    %v1681 = vpack.c.b16 %v1341, %v1337
    %v1682 = vpack.c.b16 %v1342, %v1338
    %v1683 = vpack.c.b16 %v1343, %v1339
    %v1684 = vpack.c.b16 %v1344, %v1340
    %v1685 = vpack.c.b16 %v1349, %v1345
    %v1686 = vpack.c.b16 %v1350, %v1346
    %v1687 = vpack.c.b16 %v1351, %v1347
    %v1688 = vpack.c.b16 %v1352, %v1348
    %v1689 = vpack.c.b16 %v1357, %v1353
    %v1690 = vpack.c.b16 %v1358, %v1354
    %v1691 = vpack.c.b16 %v1359, %v1355
    %v1692 = vpack.c.b16 %v1360, %v1356
    %v1693 = vpack.c.b16 %v1365, %v1361
    %v1694 = vpack.c.b16 %v1366, %v1362
    %v1695 = vpack.c.b16 %v1367, %v1363
    %v1696 = vpack.c.b16 %v1368, %v1364
    %v1697 = vpack.c.b16 %v1373, %v1369
    %v1698 = vpack.c.b16 %v1374, %v1370
    %v1699 = vpack.c.b16 %v1375, %v1371
    %v1700 = vpack.c.b16 %v1376, %v1372
    %v1701 = vpack.c.b16 %v1381, %v1377
    %v1702 = vpack.c.b16 %v1382, %v1378
    %v1703 = vpack.c.b16 %v1383, %v1379
    %v1704 = vpack.c.b16 %v1384, %v1380
    %v1705 = vpack.c.b16 %v1389, %v1385
    %v1706 = vpack.c.b16 %v1390, %v1386
    %v1707 = vpack.c.b16 %v1391, %v1387
    %v1708 = vpack.c.b16 %v1392, %v1388
    %v1709 = vpack.c.b16 %v1397, %v1393
    %v1710 = vpack.c.b16 %v1398, %v1394
    %v1711 = vpack.c.b16 %v1399, %v1395
    %v1712 = vpack.c.b16 %v1400, %v1396
    %v1713 = vpack.c.b16 %v1405, %v1401
    %v1714 = vpack.c.b16 %v1406, %v1402
    %v1715 = vpack.c.b16 %v1407, %v1403
    %v1716 = vpack.c.b16 %v1408, %v1404
    %v1717 = vpack.c.b16 %v1413, %v1409
    %v1718 = vpack.c.b16 %v1414, %v1410
    %v1719 = vpack.c.b16 %v1415, %v1411
    %v1720 = vpack.c.b16 %v1416, %v1412
    %v1721 = vpack.c.b16 %v1421, %v1417
    %v1722 = vpack.c.b16 %v1422, %v1418
    %v1723 = vpack.c.b16 %v1423, %v1419
    %v1724 = vpack.c.b16 %v1424, %v1420
    %v1725 = vpack.c.b16 %v1429, %v1425
    %v1726 = vpack.c.b16 %v1430, %v1426
    %v1727 = vpack.c.b16 %v1431, %v1427
    %v1728 = vpack.c.b16 %v1432, %v1428
    %v1729 = vpack.c.b16 %v1437, %v1433
    %v1730 = vpack.c.b16 %v1438, %v1434
    %v1731 = vpack.c.b16 %v1439, %v1435
    %v1732 = vpack.c.b16 %v1440, %v1436
    %v1733 = vpack.c.b16 %v1445, %v1441
    %v1734 = vpack.c.b16 %v1446, %v1442
    %v1735 = vpack.c.b16 %v1447, %v1443
    %v1736 = vpack.c.b16 %v1448, %v1444
    %v1737 = vpack.c.b16 %v1453, %v1449
    %v1738 = vpack.c.b16 %v1454, %v1450
    %v1739 = vpack.c.b16 %v1455, %v1451
    %v1740 = vpack.c.b16 %v1456, %v1452
    %v1741 = vpack.c.b16 %v1461, %v1457
    %v1742 = vpack.c.b16 %v1462, %v1458
    %v1743 = vpack.c.b16 %v1463, %v1459
    %v1744 = vpack.c.b16 %v1464, %v1460
    %v1745 = vpack.c.b16 %v1469, %v1465
    %v1746 = vpack.c.b16 %v1470, %v1466
    %v1747 = vpack.c.b16 %v1471, %v1467
    %v1748 = vpack.c.b16 %v1472, %v1468
    %v1749 = vpack.c.b16 %v1477, %v1473
    %v1750 = vpack.c.b16 %v1478, %v1474
    %v1751 = vpack.c.b16 %v1479, %v1475
    %v1752 = vpack.c.b16 %v1480, %v1476
    %v1753 = vpack.c.b16 %v1485, %v1481
    %v1754 = vpack.c.b16 %v1486, %v1482
    %v1755 = vpack.c.b16 %v1487, %v1483
    %v1756 = vpack.c.b16 %v1488, %v1484
    %v1757 = vpack.c.b16 %v1493, %v1489
    %v1758 = vpack.c.b16 %v1494, %v1490
    %v1759 = vpack.c.b16 %v1495, %v1491
    %v1760 = vpack.c.b16 %v1496, %v1492
    %v1761 = vpack.c.b16 %v1501, %v1497
    %v1762 = vpack.c.b16 %v1502, %v1498
    %v1763 = vpack.c.b16 %v1503, %v1499
    %v1764 = vpack.c.b16 %v1504, %v1500
    %v1765 = vpack.c.b16 %v1509, %v1505
    %v1766 = vpack.c.b16 %v1510, %v1506
    %v1767 = vpack.c.b16 %v1511, %v1507
    %v1768 = vpack.c.b16 %v1512, %v1508
    %2025 = vmatprep.subr.bf16.mxu0 %v1514
    %2026 = vmatpush1.bf16.msra.mxu0 %v1513
    %2027 = vmatprep.subr.bf16.mxu0 %v1518
    %2028 = vmatpush1.bf16.msra.mxu0 %v1517
    %2029 = vmatprep.subr.bf16.mxu0 %v1522
    %2030 = vmatpush1.bf16.msra.mxu0 %v1521
    %2031 = vmatprep.subr.bf16.mxu0 %v1526
    %2032 = vmatpush1.bf16.msra.mxu0 %v1525
    %2033 = vmatprep.subr.bf16.mxu0 %v1530
    %2034 = vmatpush1.bf16.msra.mxu0 %v1529
    %2035 = vmatprep.subr.bf16.mxu0 %v1534
    %2036 = vmatpush1.bf16.msra.mxu0 %v1533
    %2037 = vmatprep.subr.bf16.mxu0 %v1538
    %2038 = vmatpush1.bf16.msra.mxu0 %v1537
    %2039 = vmatprep.subr.bf16.mxu0 %v1542
    %2040 = vmatpush1.bf16.msra.mxu0 %v1541
    %2041 = vmatprep.subr.bf16.mxu0 %v1546
    %2042 = vmatpush1.bf16.msra.mxu0 %v1545
    %2043 = vmatprep.subr.bf16.mxu0 %v1550
    %2044 = vmatpush1.bf16.msra.mxu0 %v1549
    %2045 = vmatprep.subr.bf16.mxu0 %v1554
    %2046 = vmatpush1.bf16.msra.mxu0 %v1553
    %2047 = vmatprep.subr.bf16.mxu0 %v1558
    %2048 = vmatpush1.bf16.msra.mxu0 %v1557
    %2049 = vmatprep.subr.bf16.mxu0 %v1562
    %2050 = vmatpush1.bf16.msra.mxu0 %v1561
    %2051 = vmatprep.subr.bf16.mxu0 %v1566
    %2052 = vmatpush1.bf16.msra.mxu0 %v1565
    %2053 = vmatprep.subr.bf16.mxu0 %v1570
    %2054 = vmatpush1.bf16.msra.mxu0 %v1569
    %2055 = vmatprep.subr.bf16.mxu0 %v1574
    %2056 = vmatpush1.bf16.msra.mxu0 %v1573
    %2057 = vmatprep.mubr.bf16.mxu0 %v482
    %2058 = vmatmul.mubr.bf16.gmra.mrb[0].mxu0 %v481
    %v2059 = vpop.f32.mrb[0].mxu0
    %v2060 = vadd.f32 0.0, %v2059
    %v2061 = vpop.f32.mrb[0].mxu0
    %v2062 = vadd.f32 0.0, %v2061
    %v2063 = vpop.f32.mrb[0].mxu0
    %v2064 = vpop.f32.mrb[0].mxu0
    %2065 = vdwg.mxu0
    %2066 = vmatprep.subr.bf16.mxu0 %v1578
    %2067 = vmatpush1.bf16.msra.mxu0 %v1577
    %2068 = vmatprep.subr.bf16.mxu0 %v1582
    %2069 = vmatpush1.bf16.msra.mxu0 %v1581
    %2070 = vmatprep.subr.bf16.mxu0 %v1586
    %2071 = vmatpush1.bf16.msra.mxu0 %v1585
    %2072 = vmatprep.subr.bf16.mxu0 %v1590
    %2073 = vmatpush1.bf16.msra.mxu0 %v1589
    %2074 = vmatprep.subr.bf16.mxu0 %v1594
    %2075 = vmatpush1.bf16.msra.mxu0 %v1593
    %2076 = vmatprep.subr.bf16.mxu0 %v1598
    %2077 = vmatpush1.bf16.msra.mxu0 %v1597
    %2078 = vmatprep.subr.bf16.mxu0 %v1602
    %2079 = vmatpush1.bf16.msra.mxu0 %v1601
    %2080 = vmatprep.subr.bf16.mxu0 %v1606
    %2081 = vmatpush1.bf16.msra.mxu0 %v1605
    %2082 = vmatprep.subr.bf16.mxu0 %v1610
    %2083 = vmatpush1.bf16.msra.mxu0 %v1609
    %2084 = vmatprep.subr.bf16.mxu0 %v1614
    %2085 = vmatpush1.bf16.msra.mxu0 %v1613
    %2086 = vmatprep.subr.bf16.mxu0 %v1618
    %2087 = vmatpush1.bf16.msra.mxu0 %v1617
    %2088 = vmatprep.subr.bf16.mxu0 %v1622
    %2089 = vmatpush1.bf16.msra.mxu0 %v1621
    %2090 = vmatprep.subr.bf16.mxu0 %v1626
    %2091 = vmatpush1.bf16.msra.mxu0 %v1625
    %2092 = vmatprep.subr.bf16.mxu0 %v1630
    %2093 = vmatpush1.bf16.msra.mxu0 %v1629
    %2094 = vmatprep.subr.bf16.mxu0 %v1634
    %2095 = vmatpush1.bf16.msra.mxu0 %v1633
    %2096 = vmatprep.subr.bf16.mxu0 %v1638
    %2097 = vmatpush1.bf16.msra.mxu0 %v1637
    %2098 = vmatprep.mubr.bf16.mxu0 %v484
    %2099 = vmatmul.mubr.bf16.gmra.mrb[0].mxu0 %v483
    %v2100 = vpop.f32.mrb[0].mxu0
    %v2101 = vadd.f32 %v2060, %v2100
    %v2102 = vpop.f32.mrb[0].mxu0
    %v2103 = vadd.f32 %v2062, %v2102
    %v2104 = vpop.f32.mrb[0].mxu0
    %v2105 = vpop.f32.mrb[0].mxu0
    %2106 = vdwg.mxu0
    %2107 = vmatprep.subr.bf16.mxu0 %v1642
    %2108 = vmatpush1.bf16.msra.mxu0 %v1641
    %2109 = vmatprep.subr.bf16.mxu0 %v1646
    %2110 = vmatpush1.bf16.msra.mxu0 %v1645
    %2111 = vmatprep.subr.bf16.mxu0 %v1650
    %2112 = vmatpush1.bf16.msra.mxu0 %v1649
    %2113 = vmatprep.subr.bf16.mxu0 %v1654
    %2114 = vmatpush1.bf16.msra.mxu0 %v1653
    %2115 = vmatprep.subr.bf16.mxu0 %v1658
    %2116 = vmatpush1.bf16.msra.mxu0 %v1657
    %2117 = vmatprep.subr.bf16.mxu0 %v1662
    %2118 = vmatpush1.bf16.msra.mxu0 %v1661
    %2119 = vmatprep.subr.bf16.mxu0 %v1666
    %2120 = vmatpush1.bf16.msra.mxu0 %v1665
    %2121 = vmatprep.subr.bf16.mxu0 %v1670
    %2122 = vmatpush1.bf16.msra.mxu0 %v1669
    %2123 = vmatprep.subr.bf16.mxu0 %v1674
    %2124 = vmatpush1.bf16.msra.mxu0 %v1673
    %2125 = vmatprep.subr.bf16.mxu0 %v1678
    %2126 = vmatpush1.bf16.msra.mxu0 %v1677
    %2127 = vmatprep.subr.bf16.mxu0 %v1682
    %2128 = vmatpush1.bf16.msra.mxu0 %v1681
    %2129 = vmatprep.subr.bf16.mxu0 %v1686
    %2130 = vmatpush1.bf16.msra.mxu0 %v1685
    %2131 = vmatprep.subr.bf16.mxu0 %v1690
    %2132 = vmatpush1.bf16.msra.mxu0 %v1689
    %2133 = vmatprep.subr.bf16.mxu0 %v1694
    %2134 = vmatpush1.bf16.msra.mxu0 %v1693
    %2135 = vmatprep.subr.bf16.mxu0 %v1698
    %2136 = vmatpush1.bf16.msra.mxu0 %v1697
    %2137 = vmatprep.subr.bf16.mxu0 %v1702
    %2138 = vmatpush1.bf16.msra.mxu0 %v1701
    %2139 = vmatprep.mubr.bf16.mxu0 %v486
    %2140 = vmatmul.mubr.bf16.gmra.mrb[0].mxu0 %v485
    %v2141 = vpop.f32.mrb[0].mxu0
    %v2142 = vadd.f32 %v2101, %v2141
    %v2143 = vpop.f32.mrb[0].mxu0
    %v2144 = vadd.f32 %v2103, %v2143
    %v2145 = vpop.f32.mrb[0].mxu0
    %v2146 = vpop.f32.mrb[0].mxu0
    %2147 = vdwg.mxu0
    %2148 = vmatprep.subr.bf16.mxu0 %v1706
    %2149 = vmatpush1.bf16.msra.mxu0 %v1705
    %2150 = vmatprep.subr.bf16.mxu0 %v1710
    %2151 = vmatpush1.bf16.msra.mxu0 %v1709
    %2152 = vmatprep.subr.bf16.mxu0 %v1714
    %2153 = vmatpush1.bf16.msra.mxu0 %v1713
    %2154 = vmatprep.subr.bf16.mxu0 %v1718
    %2155 = vmatpush1.bf16.msra.mxu0 %v1717
    %2156 = vmatprep.subr.bf16.mxu0 %v1722
    %2157 = vmatpush1.bf16.msra.mxu0 %v1721
    %2158 = vmatprep.subr.bf16.mxu0 %v1726
    %2159 = vmatpush1.bf16.msra.mxu0 %v1725
    %2160 = vmatprep.subr.bf16.mxu0 %v1730
    %2161 = vmatpush1.bf16.msra.mxu0 %v1729
    %2162 = vmatprep.subr.bf16.mxu0 %v1734
    %2163 = vmatpush1.bf16.msra.mxu0 %v1733
    %2164 = vmatprep.subr.bf16.mxu0 %v1738
    %2165 = vmatpush1.bf16.msra.mxu0 %v1737
    %2166 = vmatprep.subr.bf16.mxu0 %v1742
    %2167 = vmatpush1.bf16.msra.mxu0 %v1741
    %2168 = vmatprep.subr.bf16.mxu0 %v1746
    %2169 = vmatpush1.bf16.msra.mxu0 %v1745
    %2170 = vmatprep.subr.bf16.mxu0 %v1750
    %2171 = vmatpush1.bf16.msra.mxu0 %v1749
    %2172 = vmatprep.subr.bf16.mxu0 %v1754
    %2173 = vmatpush1.bf16.msra.mxu0 %v1753
    %2174 = vmatprep.subr.bf16.mxu0 %v1758
    %2175 = vmatpush1.bf16.msra.mxu0 %v1757
    %2176 = vmatprep.subr.bf16.mxu0 %v1762
    %2177 = vmatpush1.bf16.msra.mxu0 %v1761
    %2178 = vmatprep.subr.bf16.mxu0 %v1766
    %2179 = vmatpush1.bf16.msra.mxu0 %v1765
    %2180 = vmatprep.mubr.bf16.mxu0 %v488
    %2181 = vmatmul.mubr.bf16.gmra.mrb[0].mxu0 %v487
    %v2182 = vpop.f32.mrb[0].mxu0
    %v2183 = vadd.f32 %v2142, %v2182
    %v2184 = vpop.f32.mrb[0].mxu0
    %v2185 = vadd.f32 %v2144, %v2184
    %v2186 = vpop.f32.mrb[0].mxu0
    %v2187 = vpop.f32.mrb[0].mxu0
    %2188 = vdwg.mxu0
    %2189 = vmatprep.subr.bf16.mxu0 %v1516
    %2190 = vmatpush1.bf16.msra.mxu0 %v1515
    %2191 = vmatprep.subr.bf16.mxu0 %v1520
    %2192 = vmatpush1.bf16.msra.mxu0 %v1519
    %2193 = vmatprep.subr.bf16.mxu0 %v1524
    %2194 = vmatpush1.bf16.msra.mxu0 %v1523
    %2195 = vmatprep.subr.bf16.mxu0 %v1528
    %2196 = vmatpush1.bf16.msra.mxu0 %v1527
    %2197 = vmatprep.subr.bf16.mxu0 %v1532
    %2198 = vmatpush1.bf16.msra.mxu0 %v1531
    %2199 = vmatprep.subr.bf16.mxu0 %v1536
    %2200 = vmatpush1.bf16.msra.mxu0 %v1535
    %2201 = vmatprep.subr.bf16.mxu0 %v1540
    %2202 = vmatpush1.bf16.msra.mxu0 %v1539
    %2203 = vmatprep.subr.bf16.mxu0 %v1544
    %2204 = vmatpush1.bf16.msra.mxu0 %v1543
    %2205 = vmatprep.subr.bf16.mxu0 %v1548
    %2206 = vmatpush1.bf16.msra.mxu0 %v1547
    %2207 = vmatprep.subr.bf16.mxu0 %v1552
    %2208 = vmatpush1.bf16.msra.mxu0 %v1551
    %2209 = vmatprep.subr.bf16.mxu0 %v1556
    %2210 = vmatpush1.bf16.msra.mxu0 %v1555
    %2211 = vmatprep.subr.bf16.mxu0 %v1560
    %2212 = vmatpush1.bf16.msra.mxu0 %v1559
    %2213 = vmatprep.subr.bf16.mxu0 %v1564
    %2214 = vmatpush1.bf16.msra.mxu0 %v1563
    %2215 = vmatprep.subr.bf16.mxu0 %v1568
    %2216 = vmatpush1.bf16.msra.mxu0 %v1567
    %2217 = vmatprep.subr.bf16.mxu0 %v1572
    %2218 = vmatpush1.bf16.msra.mxu0 %v1571
    %2219 = vmatprep.subr.bf16.mxu0 %v1576
    %2220 = vmatpush1.bf16.msra.mxu0 %v1575
    %2221 = vmatprep.mubr.bf16.mxu0 %v482
    %2222 = vmatmul.mubr.bf16.gmra.mrb[0].mxu0 %v481
    %v2223 = vpop.f32.mrb[0].mxu0
    %v2224 = vadd.f32 0.0, %v2223
    %v2225 = vpop.f32.mrb[0].mxu0
    %v2226 = vadd.f32 0.0, %v2225
    %v2227 = vpop.f32.mrb[0].mxu0
    %v2228 = vpop.f32.mrb[0].mxu0
    %2229 = vdwg.mxu0
    %2230 = vmatprep.subr.bf16.mxu0 %v1580
    %2231 = vmatpush1.bf16.msra.mxu0 %v1579
    %2232 = vmatprep.subr.bf16.mxu0 %v1584
    %2233 = vmatpush1.bf16.msra.mxu0 %v1583
    %2234 = vmatprep.subr.bf16.mxu0 %v1588
    %2235 = vmatpush1.bf16.msra.mxu0 %v1587
    %2236 = vmatprep.subr.bf16.mxu0 %v1592
    %2237 = vmatpush1.bf16.msra.mxu0 %v1591
    %2238 = vmatprep.subr.bf16.mxu0 %v1596
    %2239 = vmatpush1.bf16.msra.mxu0 %v1595
    %2240 = vmatprep.subr.bf16.mxu0 %v1600
    %2241 = vmatpush1.bf16.msra.mxu0 %v1599
    %2242 = vmatprep.subr.bf16.mxu0 %v1604
    %2243 = vmatpush1.bf16.msra.mxu0 %v1603
    %2244 = vmatprep.subr.bf16.mxu0 %v1608
    %2245 = vmatpush1.bf16.msra.mxu0 %v1607
    %2246 = vmatprep.subr.bf16.mxu0 %v1612
    %2247 = vmatpush1.bf16.msra.mxu0 %v1611
    %2248 = vmatprep.subr.bf16.mxu0 %v1616
    %2249 = vmatpush1.bf16.msra.mxu0 %v1615
    %2250 = vmatprep.subr.bf16.mxu0 %v1620
    %2251 = vmatpush1.bf16.msra.mxu0 %v1619
    %2252 = vmatprep.subr.bf16.mxu0 %v1624
    %2253 = vmatpush1.bf16.msra.mxu0 %v1623
    %2254 = vmatprep.subr.bf16.mxu0 %v1628
    %2255 = vmatpush1.bf16.msra.mxu0 %v1627
    %2256 = vmatprep.subr.bf16.mxu0 %v1632
    %2257 = vmatpush1.bf16.msra.mxu0 %v1631
    %2258 = vmatprep.subr.bf16.mxu0 %v1636
    %2259 = vmatpush1.bf16.msra.mxu0 %v1635
    %2260 = vmatprep.subr.bf16.mxu0 %v1640
    %2261 = vmatpush1.bf16.msra.mxu0 %v1639
    %2262 = vmatprep.mubr.bf16.mxu0 %v484
    %2263 = vmatmul.mubr.bf16.gmra.mrb[0].mxu0 %v483
    %v2264 = vpop.f32.mrb[0].mxu0
    %v2265 = vadd.f32 %v2224, %v2264
    %v2266 = vpop.f32.mrb[0].mxu0
    %v2267 = vadd.f32 %v2226, %v2266
    %v2268 = vpop.f32.mrb[0].mxu0
    %v2269 = vpop.f32.mrb[0].mxu0
    %2270 = vdwg.mxu0
    %2271 = vmatprep.subr.bf16.mxu0 %v1644
    %2272 = vmatpush1.bf16.msra.mxu0 %v1643
    %2273 = vmatprep.subr.bf16.mxu0 %v1648
    %2274 = vmatpush1.bf16.msra.mxu0 %v1647
    %2275 = vmatprep.subr.bf16.mxu0 %v1652
    %2276 = vmatpush1.bf16.msra.mxu0 %v1651
    %2277 = vmatprep.subr.bf16.mxu0 %v1656
    %2278 = vmatpush1.bf16.msra.mxu0 %v1655
    %2279 = vmatprep.subr.bf16.mxu0 %v1660
    %2280 = vmatpush1.bf16.msra.mxu0 %v1659
    %2281 = vmatprep.subr.bf16.mxu0 %v1664
    %2282 = vmatpush1.bf16.msra.mxu0 %v1663
    %2283 = vmatprep.subr.bf16.mxu0 %v1668
    %2284 = vmatpush1.bf16.msra.mxu0 %v1667
    %2285 = vmatprep.subr.bf16.mxu0 %v1672
    %2286 = vmatpush1.bf16.msra.mxu0 %v1671
    %2287 = vmatprep.subr.bf16.mxu0 %v1676
    %2288 = vmatpush1.bf16.msra.mxu0 %v1675
    %2289 = vmatprep.subr.bf16.mxu0 %v1680
    %2290 = vmatpush1.bf16.msra.mxu0 %v1679
    %2291 = vmatprep.subr.bf16.mxu0 %v1684
    %2292 = vmatpush1.bf16.msra.mxu0 %v1683
    %2293 = vmatprep.subr.bf16.mxu0 %v1688
    %2294 = vmatpush1.bf16.msra.mxu0 %v1687
    %2295 = vmatprep.subr.bf16.mxu0 %v1692
    %2296 = vmatpush1.bf16.msra.mxu0 %v1691
    %2297 = vmatprep.subr.bf16.mxu0 %v1696
    %2298 = vmatpush1.bf16.msra.mxu0 %v1695
    %2299 = vmatprep.subr.bf16.mxu0 %v1700
    %2300 = vmatpush1.bf16.msra.mxu0 %v1699
    %2301 = vmatprep.subr.bf16.mxu0 %v1704
    %2302 = vmatpush1.bf16.msra.mxu0 %v1703
    %2303 = vmatprep.mubr.bf16.mxu0 %v486
    %2304 = vmatmul.mubr.bf16.gmra.mrb[0].mxu0 %v485
    %v2305 = vpop.f32.mrb[0].mxu0
    %v2306 = vadd.f32 %v2265, %v2305
    %v2307 = vpop.f32.mrb[0].mxu0
    %v2308 = vadd.f32 %v2267, %v2307
    %v2309 = vpop.f32.mrb[0].mxu0
    %v2310 = vpop.f32.mrb[0].mxu0
    %2311 = vdwg.mxu0
    %2312 = vmatprep.subr.bf16.mxu0 %v1708
    %2313 = vmatpush1.bf16.msra.mxu0 %v1707
    %2314 = vmatprep.subr.bf16.mxu0 %v1712
    %2315 = vmatpush1.bf16.msra.mxu0 %v1711
    %2316 = vmatprep.subr.bf16.mxu0 %v1716
    %2317 = vmatpush1.bf16.msra.mxu0 %v1715
    %2318 = vmatprep.subr.bf16.mxu0 %v1720
    %2319 = vmatpush1.bf16.msra.mxu0 %v1719
    %2320 = vmatprep.subr.bf16.mxu0 %v1724
    %2321 = vmatpush1.bf16.msra.mxu0 %v1723
    %2322 = vmatprep.subr.bf16.mxu0 %v1728
    %2323 = vmatpush1.bf16.msra.mxu0 %v1727
    %2324 = vmatprep.subr.bf16.mxu0 %v1732
    %2325 = vmatpush1.bf16.msra.mxu0 %v1731
    %2326 = vmatprep.subr.bf16.mxu0 %v1736
    %2327 = vmatpush1.bf16.msra.mxu0 %v1735
    %2328 = vmatprep.subr.bf16.mxu0 %v1740
    %2329 = vmatpush1.bf16.msra.mxu0 %v1739
    %2330 = vmatprep.subr.bf16.mxu0 %v1744
    %2331 = vmatpush1.bf16.msra.mxu0 %v1743
    %2332 = vmatprep.subr.bf16.mxu0 %v1748
    %2333 = vmatpush1.bf16.msra.mxu0 %v1747
    %2334 = vmatprep.subr.bf16.mxu0 %v1752
    %2335 = vmatpush1.bf16.msra.mxu0 %v1751
    %2336 = vmatprep.subr.bf16.mxu0 %v1756
    %2337 = vmatpush1.bf16.msra.mxu0 %v1755
    %2338 = vmatprep.subr.bf16.mxu0 %v1760
    %2339 = vmatpush1.bf16.msra.mxu0 %v1759
    %2340 = vmatprep.subr.bf16.mxu0 %v1764
    %2341 = vmatpush1.bf16.msra.mxu0 %v1763
    %2342 = vmatprep.subr.bf16.mxu0 %v1768
    %2343 = vmatpush1.bf16.msra.mxu0 %v1767
    %2344 = vmatprep.mubr.bf16.mxu0 %v488
    %2345 = vmatmul.mubr.bf16.gmra.mrb[0].mxu0 %v487
    %v2346 = vpop.f32.mrb[0].mxu0
    %v2347 = vadd.f32 %v2306, %v2346
    %v2348 = vpop.f32.mrb[0].mxu0
    %v2349 = vadd.f32 %v2308, %v2348
    %v2350 = vpop.f32.mrb[0].mxu0
    %v2351 = vpop.f32.mrb[0].mxu0
    %2352 = vdwg.mxu0
    %v2353 = vpack.c.bf16 %v2183, %v2183
    %v2354 = vpack.c.bf16 %v2185, %v2185
    %v2355 = vpack.c.bf16 %v2347, %v2347
    %v2356 = vpack.c.bf16 %v2349, %v2349
    %v2357 = vld [vmem:[%s4] sm:$0xf]
    %v2360 = vunpack.c.l.s4 1966171168
    %v2361 = vunpack.c.0.s8 %v2360
    %v2362 = vlaneseq
    %v2363 = vshrl.u32 %v2362, 7
    %v2364 = vsub.s32 %v2361, %v2363
    %v2365 = vrot.slane %v2357, %v2364
    %v2366 = vcombine.high %v2365, %v2365
    %v2368 = vunpack.c.l.s4 1966171168
    %v2369 = vunpack.c.0.s8 %v2368
    %v2370 = vlaneseq
    %v2371 = vshrl.u32 %v2370, 7
    %v2372 = vsub.s32 %v2369, %v2371
    %v2373 = vrot.slane %v2365, %v2372
    %v2375 = vunpack.c.l.s4 1966171168
    %v2376 = vunpack.c.0.s8 %v2375
    %v2377 = vlaneseq
    %v2378 = vshrl.u32 %v2377, 7
    %v2379 = vsub.s32 %v2376, %v2378
    %v2380 = vrot.slane %v2366, %v2379
    %v2381 = vcombine.high %v2373, %v2373
    %v2382 = vcombine.high %v2380, %v2380
    %v2384 = vpack.i.b16 %v2373, %v2373
    %v2386 = vlaneseq
    %v2387 = vshrl.u32 %v2386, 7
    %v2388 = vsub.s32 0, %v2387
    %v2389 = vrot.slane %v2384, %v2388
    %v2391 = vpack.i.b16 %v2380, %v2380
    %v2393 = vlaneseq
    %v2394 = vshrl.u32 %v2393, 7
    %v2395 = vsub.s32 0, %v2394
    %v2396 = vrot.slane %v2391, %v2395
    %v2398 = vpack.i.b16 %v2381, %v2381
    %v2400 = vlaneseq
    %v2401 = vshrl.u32 %v2400, 7
    %v2402 = vsub.s32 0, %v2401
    %v2403 = vrot.slane %v2398, %v2402
    %v2405 = vpack.i.b16 %v2382, %v2382
    %v2407 = vlaneseq
    %v2408 = vshrl.u32 %v2407, 7
    %v2409 = vsub.s32 0, %v2408
    %v2410 = vrot.slane %v2405, %v2409
    %v2411 = vadd.bf16 %v2353, %v2389
    %v2412 = vadd.bf16 %v2354, %v2396
    %v2413 = vadd.bf16 %v2355, %v2403
    %v2414 = vadd.bf16 %v2356, %v2410
    %v2415 = vtanh.bf16.pop %v2411
    %v2416 = vtanh.bf16.pop %v2412
    %v2417 = vtanh.bf16.pop %v2413
    %v2418 = vtanh.bf16.pop %v2414
    %v2419 = vld [vmem:[#allocation10] sm:$0xf]
    %v2420 = vld [vmem:[#allocation10 + $0x4] sm:$0xf]
    %v2421 = vld [vmem:[#allocation10 + $0x8] sm:$0xf]
    %v2422 = vld [vmem:[#allocation10 + $0xc] sm:$0xf]
    %v2423 = vld [vmem:[#allocation10 + $0x10] sm:$0xf]
    %v2424 = vld [vmem:[#allocation10 + $0x14] sm:$0xf]
    %v2425 = vld [vmem:[#allocation10 + $0x18] sm:$0xf]
    %v2426 = vld [vmem:[#allocation10 + $0x1c] sm:$0xf]
    %v2427 = vld [vmem:[#allocation10 + $0x20] sm:$0xf]
    %v2428 = vld [vmem:[#allocation10 + $0x24] sm:$0xf]
    %v2429 = vld [vmem:[#allocation10 + $0x28] sm:$0xf]
    %v2430 = vld [vmem:[#allocation10 + $0x2c] sm:$0xf]
    %v2431 = vld [vmem:[#allocation10 + $0x30] sm:$0xf]
    %v2432 = vld [vmem:[#allocation10 + $0x34] sm:$0xf]
    %v2433 = vld [vmem:[#allocation10 + $0x38] sm:$0xf]
    %v2434 = vld [vmem:[#allocation10 + $0x3c] sm:$0xf]
    %v2435 = vld [vmem:[#allocation10 + $0x40] sm:$0xf]
    %v2436 = vld [vmem:[#allocation10 + $0x44] sm:$0xf]
    %v2437 = vld [vmem:[#allocation10 + $0x48] sm:$0xf]
    %v2438 = vld [vmem:[#allocation10 + $0x4c] sm:$0xf]
    %v2439 = vld [vmem:[#allocation10 + $0x50] sm:$0xf]
    %v2440 = vld [vmem:[#allocation10 + $0x54] sm:$0xf]
    %v2441 = vld [vmem:[#allocation10 + $0x58] sm:$0xf]
    %v2442 = vld [vmem:[#allocation10 + $0x5c] sm:$0xf]
    %v2443 = vld [vmem:[#allocation10 + $0x60] sm:$0xf]
    %v2444 = vld [vmem:[#allocation10 + $0x64] sm:$0xf]
    %v2445 = vld [vmem:[#allocation10 + $0x68] sm:$0xf]
    %v2446 = vld [vmem:[#allocation10 + $0x6c] sm:$0xf]
    %v2447 = vld [vmem:[#allocation10 + $0x70] sm:$0xf]
    %v2448 = vld [vmem:[#allocation10 + $0x74] sm:$0xf]
    %v2449 = vld [vmem:[#allocation10 + $0x78] sm:$0xf]
    %v2450 = vld [vmem:[#allocation10 + $0x7c] sm:$0xf]
    %v2451 = vld [vmem:[#allocation10 + $0x80] sm:$0xf]
    %v2452 = vld [vmem:[#allocation10 + $0x84] sm:$0xf]
    %v2453 = vld [vmem:[#allocation10 + $0x88] sm:$0xf]
    %v2454 = vld [vmem:[#allocation10 + $0x8c] sm:$0xf]
    %v2455 = vld [vmem:[#allocation10 + $0x90] sm:$0xf]
    %v2456 = vld [vmem:[#allocation10 + $0x94] sm:$0xf]
    %v2457 = vld [vmem:[#allocation10 + $0x98] sm:$0xf]
    %v2458 = vld [vmem:[#allocation10 + $0x9c] sm:$0xf]
    %v2459 = vld [vmem:[#allocation10 + $0xa0] sm:$0xf]
    %v2460 = vld [vmem:[#allocation10 + $0xa4] sm:$0xf]
    %v2461 = vld [vmem:[#allocation10 + $0xa8] sm:$0xf]
    %v2462 = vld [vmem:[#allocation10 + $0xac] sm:$0xf]
    %v2463 = vld [vmem:[#allocation10 + $0xb0] sm:$0xf]
    %v2464 = vld [vmem:[#allocation10 + $0xb4] sm:$0xf]
    %v2465 = vld [vmem:[#allocation10 + $0xb8] sm:$0xf]
    %v2466 = vld [vmem:[#allocation10 + $0xbc] sm:$0xf]
    %v2467 = vld [vmem:[#allocation10 + $0xc0] sm:$0xf]
    %v2468 = vld [vmem:[#allocation10 + $0xc4] sm:$0xf]
    %v2469 = vld [vmem:[#allocation10 + $0xc8] sm:$0xf]
    %v2470 = vld [vmem:[#allocation10 + $0xcc] sm:$0xf]
    %v2471 = vld [vmem:[#allocation10 + $0xd0] sm:$0xf]
    %v2472 = vld [vmem:[#allocation10 + $0xd4] sm:$0xf]
    %v2473 = vld [vmem:[#allocation10 + $0xd8] sm:$0xf]
    %v2474 = vld [vmem:[#allocation10 + $0xdc] sm:$0xf]
    %v2475 = vld [vmem:[#allocation10 + $0xe0] sm:$0xf]
    %v2476 = vld [vmem:[#allocation10 + $0xe4] sm:$0xf]
    %v2477 = vld [vmem:[#allocation10 + $0xe8] sm:$0xf]
    %v2478 = vld [vmem:[#allocation10 + $0xec] sm:$0xf]
    %v2479 = vld [vmem:[#allocation10 + $0xf0] sm:$0xf]
    %v2480 = vld [vmem:[#allocation10 + $0xf4] sm:$0xf]
    %v2481 = vld [vmem:[#allocation10 + $0xf8] sm:$0xf]
    %v2482 = vld [vmem:[#allocation10 + $0xfc] sm:$0xf]
    %v2547 = vunpack.c.l.b16 %v2419
    %v2548 = vunpack.c.l.b16 %v2420
    %v2549 = vunpack.c.l.b16 %v2421
    %v2550 = vunpack.c.l.b16 %v2422
    %v2551 = vunpack.c.l.b16 %v2423
    %v2552 = vunpack.c.l.b16 %v2424
    %v2553 = vunpack.c.l.b16 %v2425
    %v2554 = vunpack.c.l.b16 %v2426
    %v2555 = vunpack.c.l.b16 %v2427
    %v2556 = vunpack.c.l.b16 %v2428
    %v2557 = vunpack.c.l.b16 %v2429
    %v2558 = vunpack.c.l.b16 %v2430
    %v2559 = vunpack.c.l.b16 %v2431
    %v2560 = vunpack.c.l.b16 %v2432
    %v2561 = vunpack.c.l.b16 %v2433
    %v2562 = vunpack.c.l.b16 %v2434
    %v2563 = vunpack.c.l.b16 %v2435
    %v2564 = vunpack.c.l.b16 %v2436
    %v2565 = vunpack.c.l.b16 %v2437
    %v2566 = vunpack.c.l.b16 %v2438
    %v2567 = vunpack.c.l.b16 %v2439
    %v2568 = vunpack.c.l.b16 %v2440
    %v2569 = vunpack.c.l.b16 %v2441
    %v2570 = vunpack.c.l.b16 %v2442
    %v2571 = vunpack.c.l.b16 %v2443
    %v2572 = vunpack.c.l.b16 %v2444
    %v2573 = vunpack.c.l.b16 %v2445
    %v2574 = vunpack.c.l.b16 %v2446
    %v2575 = vunpack.c.l.b16 %v2447
    %v2576 = vunpack.c.l.b16 %v2448
    %v2577 = vunpack.c.l.b16 %v2449
    %v2578 = vunpack.c.l.b16 %v2450
    %v2579 = vunpack.c.l.b16 %v2451
    %v2580 = vunpack.c.l.b16 %v2452
    %v2581 = vunpack.c.l.b16 %v2453
    %v2582 = vunpack.c.l.b16 %v2454
    %v2583 = vunpack.c.l.b16 %v2455
    %v2584 = vunpack.c.l.b16 %v2456
    %v2585 = vunpack.c.l.b16 %v2457
    %v2586 = vunpack.c.l.b16 %v2458
    %v2587 = vunpack.c.l.b16 %v2459
    %v2588 = vunpack.c.l.b16 %v2460
    %v2589 = vunpack.c.l.b16 %v2461
    %v2590 = vunpack.c.l.b16 %v2462
    %v2591 = vunpack.c.l.b16 %v2463
    %v2592 = vunpack.c.l.b16 %v2464
    %v2593 = vunpack.c.l.b16 %v2465
    %v2594 = vunpack.c.l.b16 %v2466
    %v2595 = vunpack.c.l.b16 %v2467
    %v2596 = vunpack.c.l.b16 %v2468
    %v2597 = vunpack.c.l.b16 %v2469
    %v2598 = vunpack.c.l.b16 %v2470
    %v2599 = vunpack.c.l.b16 %v2471
    %v2600 = vunpack.c.l.b16 %v2472
    %v2601 = vunpack.c.l.b16 %v2473
    %v2602 = vunpack.c.l.b16 %v2474
    %v2603 = vunpack.c.l.b16 %v2475
    %v2604 = vunpack.c.l.b16 %v2476
    %v2605 = vunpack.c.l.b16 %v2477
    %v2606 = vunpack.c.l.b16 %v2478
    %v2607 = vunpack.c.l.b16 %v2479
    %v2608 = vunpack.c.l.b16 %v2480
    %v2609 = vunpack.c.l.b16 %v2481
    %v2610 = vunpack.c.l.b16 %v2482
    %v2611 = vpack.c.b16 %v2548, %v2547
    %v2612 = vpack.c.b16 %v2550, %v2549
    %v2613 = vpack.c.b16 %v2552, %v2551
    %v2614 = vpack.c.b16 %v2554, %v2553
    %v2615 = vpack.c.b16 %v2556, %v2555
    %v2616 = vpack.c.b16 %v2558, %v2557
    %v2617 = vpack.c.b16 %v2560, %v2559
    %v2618 = vpack.c.b16 %v2562, %v2561
    %v2619 = vpack.c.b16 %v2564, %v2563
    %v2620 = vpack.c.b16 %v2566, %v2565
    %v2621 = vpack.c.b16 %v2568, %v2567
    %v2622 = vpack.c.b16 %v2570, %v2569
    %v2623 = vpack.c.b16 %v2572, %v2571
    %v2624 = vpack.c.b16 %v2574, %v2573
    %v2625 = vpack.c.b16 %v2576, %v2575
    %v2626 = vpack.c.b16 %v2578, %v2577
    %v2627 = vpack.c.b16 %v2580, %v2579
    %v2628 = vpack.c.b16 %v2582, %v2581
    %v2629 = vpack.c.b16 %v2584, %v2583
    %v2630 = vpack.c.b16 %v2586, %v2585
    %v2631 = vpack.c.b16 %v2588, %v2587
    %v2632 = vpack.c.b16 %v2590, %v2589
    %v2633 = vpack.c.b16 %v2592, %v2591
    %v2634 = vpack.c.b16 %v2594, %v2593
    %v2635 = vpack.c.b16 %v2596, %v2595
    %v2636 = vpack.c.b16 %v2598, %v2597
    %v2637 = vpack.c.b16 %v2600, %v2599
    %v2638 = vpack.c.b16 %v2602, %v2601
    %v2639 = vpack.c.b16 %v2604, %v2603
    %v2640 = vpack.c.b16 %v2606, %v2605
    %v2641 = vpack.c.b16 %v2608, %v2607
    %v2642 = vpack.c.b16 %v2610, %v2609
    %2675 = vmatprep.subr.bf16.mxu0 0
    %2676 = vmatpush1.bf16.msra.mxu0 %v2611
    %2677 = vmatprep.subr.bf16.mxu0 0
    %2678 = vmatpush1.bf16.msra.mxu0 %v2612
    %2679 = vmatprep.subr.bf16.mxu0 0
    %2680 = vmatpush1.bf16.msra.mxu0 %v2613
    %2681 = vmatprep.subr.bf16.mxu0 0
    %2682 = vmatpush1.bf16.msra.mxu0 %v2614
    %2683 = vmatprep.subr.bf16.mxu0 0
    %2684 = vmatpush1.bf16.msra.mxu0 %v2615
    %2685 = vmatprep.subr.bf16.mxu0 0
    %2686 = vmatpush1.bf16.msra.mxu0 %v2616
    %2687 = vmatprep.subr.bf16.mxu0 0
    %2688 = vmatpush1.bf16.msra.mxu0 %v2617
    %2689 = vmatprep.subr.bf16.mxu0 0
    %2690 = vmatpush1.bf16.msra.mxu0 %v2618
    %2691 = vmatprep.subr.bf16.mxu0 0
    %2692 = vmatpush1.bf16.msra.mxu0 %v2619
    %2693 = vmatprep.subr.bf16.mxu0 0
    %2694 = vmatpush1.bf16.msra.mxu0 %v2620
    %2695 = vmatprep.subr.bf16.mxu0 0
    %2696 = vmatpush1.bf16.msra.mxu0 %v2621
    %2697 = vmatprep.subr.bf16.mxu0 0
    %2698 = vmatpush1.bf16.msra.mxu0 %v2622
    %2699 = vmatprep.subr.bf16.mxu0 0
    %2700 = vmatpush1.bf16.msra.mxu0 %v2623
    %2701 = vmatprep.subr.bf16.mxu0 0
    %2702 = vmatpush1.bf16.msra.mxu0 %v2624
    %2703 = vmatprep.subr.bf16.mxu0 0
    %2704 = vmatpush1.bf16.msra.mxu0 %v2625
    %2705 = vmatprep.subr.bf16.mxu0 0
    %2706 = vmatpush1.bf16.msra.mxu0 %v2626
    %2707 = vmatprep.mubr.bf16.mxu0 %v2416
    %2708 = vmatmul.mubr.bf16.gmra.mrb[0].mxu0 %v2415
    %v2709 = vpop.f32.mrb[0].mxu0
    %v2710 = vadd.f32 0.0, %v2709
    %v2711 = vpop.f32.mrb[0].mxu0
    %v2712 = vpop.f32.mrb[0].mxu0
    %v2713 = vpop.f32.mrb[0].mxu0
    %2714 = vdwg.mxu0
    %2715 = vmatprep.subr.bf16.mxu0 0
    %2716 = vmatpush1.bf16.msra.mxu0 %v2627
    %2717 = vmatprep.subr.bf16.mxu0 0
    %2718 = vmatpush1.bf16.msra.mxu0 %v2628
    %2719 = vmatprep.subr.bf16.mxu0 0
    %2720 = vmatpush1.bf16.msra.mxu0 %v2629
    %2721 = vmatprep.subr.bf16.mxu0 0
    %2722 = vmatpush1.bf16.msra.mxu0 %v2630
    %2723 = vmatprep.subr.bf16.mxu0 0
    %2724 = vmatpush1.bf16.msra.mxu0 %v2631
    %2725 = vmatprep.subr.bf16.mxu0 0
    %2726 = vmatpush1.bf16.msra.mxu0 %v2632
    %2727 = vmatprep.subr.bf16.mxu0 0
    %2728 = vmatpush1.bf16.msra.mxu0 %v2633
    %2729 = vmatprep.subr.bf16.mxu0 0
    %2730 = vmatpush1.bf16.msra.mxu0 %v2634
    %2731 = vmatprep.subr.bf16.mxu0 0
    %2732 = vmatpush1.bf16.msra.mxu0 %v2635
    %2733 = vmatprep.subr.bf16.mxu0 0
    %2734 = vmatpush1.bf16.msra.mxu0 %v2636
    %2735 = vmatprep.subr.bf16.mxu0 0
    %2736 = vmatpush1.bf16.msra.mxu0 %v2637
    %2737 = vmatprep.subr.bf16.mxu0 0
    %2738 = vmatpush1.bf16.msra.mxu0 %v2638
    %2739 = vmatprep.subr.bf16.mxu0 0
    %2740 = vmatpush1.bf16.msra.mxu0 %v2639
    %2741 = vmatprep.subr.bf16.mxu0 0
    %2742 = vmatpush1.bf16.msra.mxu0 %v2640
    %2743 = vmatprep.subr.bf16.mxu0 0
    %2744 = vmatpush1.bf16.msra.mxu0 %v2641
    %2745 = vmatprep.subr.bf16.mxu0 0
    %2746 = vmatpush1.bf16.msra.mxu0 %v2642
    %2747 = vmatprep.mubr.bf16.mxu0 %v2418
    %2748 = vmatmul.mubr.bf16.gmra.mrb[0].mxu0 %v2417
    %v2749 = vpop.f32.mrb[0].mxu0
    %v2750 = vadd.f32 %v2710, %v2749
    %v2751 = vpop.f32.mrb[0].mxu0
    %v2752 = vpop.f32.mrb[0].mxu0
    %v2753 = vpop.f32.mrb[0].mxu0
    %2754 = vdwg.mxu0
    %v2755 = vpack.c.bf16 %v2750, %v2750
    %v2756 = vld [vmem:[%s6] sm:$0x1]
    %v2758 = vpack.i.b16 %v2756, %v2756
    %v2760 = vlaneseq
    %v2761 = vshrl.u32 %v2760, 7
    %v2762 = vsub.s32 0, %v2761
    %v2763 = vrot.slane %v2758, %v2762
    %v2764 = vadd.bf16 %v2755, %v2763
    %v2765 = vtanh.bf16.pop %v2764
    %v2766 = vunpack.c.l.bf16 %v2765
    %2767 = vst [vmem:[#allocation11] sm:$0xff] %v2766
    // Predicated region
    $region50: #{tpu_custom_call.1} parent=1 // pred_check
      _
    $region51: #{tpu_custom_call.1} parent=1 // pred_check_branch
      %2769 = sbr.rel (0) target = $region53
    $region52: #{tpu_custom_call.1} parent=1 // pred_region
      %s2771 = ssub.s32 128, 128
      %2772 = vsyncadd [#allocation4], %s2771
      %s2774 = sshll.u32 [#allocation11], 4
      %s2775 = int_to_ptr.vmem [resolvable:$true] %s2774
      %2777 = dma.vmem_to_hbm [thread:$0]  %s2775, 128, %s7, [#allocation4]
    $region53: #{tpu_custom_call.1} parent=1 // pred_fallthru
      _
    // Predicated region
    $region54: #{tpu_custom_call.1} parent=1 // pred_check
      _
    $region55: #{tpu_custom_call.1} parent=1 // pred_check_branch
      %2779 = sbr.rel (0) target = $region57
    $region56: #{tpu_custom_call.1} parent=1 // pred_region
      %2780 = dma.done [#allocation4], 128
    $region57: #{tpu_custom_call.1} parent=1 // pred_fallthru
      _
    %2781 = vsyncpa [#allocation3], 1
    %2782 = vsyncpa [#allocation6], 1
    %2783 = vsyncpa [#allocation9], 1
    %2784 = vsyncpa [#allocation4], 1

</llo_original>
